<compile_context>
chip_gen: v5e
topology: v5e:2x2
jax: 0.10.0
libtpu: 0.0.40
codegen_flags: <defaults>
</compile_context>

<pallas_src>
import math
import functools

import jax
import jax.numpy as jnp
from jax.experimental import pallas as pl
from jax.experimental.pallas import tpu as pltpu

NEG_SLOPE = 0.2  # LeakyReLU(0.2)


# ----------------------------------------------------------------------------
# In-kernel helpers (operate on VMEM-resident values / refs)
# ----------------------------------------------------------------------------
def _leaky_relu(x):
    return jnp.where(x >= 0, x, NEG_SLOPE * x)


def _conv_same(x, w_ref, b_ref, act_in):
    """'same' 1-D conv on a time-major [T, Cin] f32 value.

    w_ref: [K, Cin, Cout] (tap-major), b_ref: [1, Cout].  The zero halo is
    built in-kernel (no HBM-side jnp.pad).  LeakyReLU(0) == 0, so activating
    before zero-padding matches activation-then-padded-conv in the reference.
    """
    K, cin, cout = w_ref.shape
    T = x.shape[0]
    if act_in:
        x = _leaky_relu(x)
    pad = (K - 1) // 2
    if pad > 0:
        z = jnp.zeros((pad, cin), x.dtype)
        x = jnp.concatenate([z, x, z], axis=0)
    acc = jnp.zeros((T, cout), jnp.float32)
    # Small static K; all taps of all layers live inside one fused kernel so
    # the MXU pushes are pipelined together (im2row is a further option at
    # larger channel counts).
    for k in range(K):
        acc = acc + jnp.dot(x[k:k + T, :], w_ref[k],
                            preferred_element_type=jnp.float32)
    return acc + b_ref[...]


def _pool2(v, scr_ref):
    """Average-pool a [T, C] f32 value by 2 along time via a VMEM scratch."""
    T, C = v.shape
    T2 = T // 2
    scr_ref[pl.ds(0, T), pl.ds(0, C)] = v
    a = scr_ref[pl.ds(0, T2, stride=2), pl.ds(0, C)]
    b = scr_ref[pl.ds(1, T2, stride=2), pl.ds(0, C)]
    return (a + b) * 0.5


def _fused_forward_kernel(*refs, n_layers):
    # refs = (x_ref, *param_refs, o_ref, pool_scratch)
    x_ref = refs[0]
    o_ref = refs[-2]
    scr = refs[-1]
    params = iter(refs[1:-2])

    def nxt():
        return next(params), next(params)

    # 1x1 input projection.
    h = _conv_same(x_ref[...].astype(jnp.float32), *nxt(), act_in=False)

    for _ in range(n_layers):
        # ResBlock1d(ch -> ch, scale 1): identity shortcut.
        w1, b1 = nxt()
        w2, b2 = nxt()
        h1 = _conv_same(h, w1, b1, act_in=True)
        h = h + _conv_same(h1, w2, b2, act_in=True)

        # ResBlock1d(ch -> 2ch, scale 0.5): avgpool + 1x1-conv shortcut.
        wc1, bc1 = nxt()
        wc2, bc2 = nxt()
        wsc, bsc = nxt()
        sc = _conv_same(_pool2(h, scr), wsc, bsc, act_in=False)
        h1 = _pool2(_conv_same(h, wc1, bc1, act_in=True), scr)
        h = sc + _conv_same(h1, wc2, bc2, act_in=True)

    # 1x1 output projection -> [Tf, 1].
    w_out, b_out = nxt()
    out = _conv_same(h, w_out, b_out, act_in=False)
    o_ref[...] = out.astype(o_ref.dtype)


# ----------------------------------------------------------------------------
# Wrapper: one pallas_call for the whole forward pass
# ----------------------------------------------------------------------------
def _flatten_params(params, n_layers):
    flat = list(params["proj_in"])
    for i in range(n_layers):
        a = params["blocks"][2 * i]
        b = params["blocks"][2 * i + 1]
        for conv in (a["conv1"], a["conv2"], b["conv1"], b["conv2"], b["conv_sc"]):
            flat += list(conv)
    flat += list(params["proj_out"])
    return flat


@functools.partial(jax.jit, static_argnames=("n_layers", "in_channels"))
def random_window_discriminator(x, params, *, n_layers, in_channels):
    """x: [B, t] -> [B, (t // in_channels) // 2**n_layers]."""
    B, t = x.shape
    T0 = t // in_channels
    assert T0 % (2 ** n_layers) == 0, "window length must divide by 2**n_layers"
    Tf = T0 // (2 ** n_layers)

    # x.unfold(1, C, C).permute(0, 2, 1) (NCL) == this reshape in our NLC layout.
    h0 = x[:, :T0 * in_channels].reshape(B, T0, in_channels)

    flat = _flatten_params(params, n_layers)
    w3_map = lambda i: (0, 0, 0)
    b2_map = lambda i: (0, 0)
    param_specs = [pl.BlockSpec(p.shape, w3_map if p.ndim == 3 else b2_map)
                   for p in flat]

    # Largest pre-pool activation is [T0, base * 2**n_layers] (= channels
    # entering proj_out); one small f32 scratch serves every pooling step.
    c_max = params["proj_out"][0].shape[1]

    kernel = functools.partial(_fused_forward_kernel, n_layers=n_layers)
    out = pl.pallas_call(
        kernel,
        out_shape=jax.ShapeDtypeStruct((B, Tf, 1), x.dtype),
        grid=(B,),
        in_specs=[pl.BlockSpec((None, T0, in_channels), lambda i: (i, 0, 0))]
                 + param_specs,
        out_specs=pl.BlockSpec((None, Tf, 1), lambda i: (i, 0, 0)),
        scratch_shapes=[pltpu.VMEM((T0, c_max), jnp.float32)],
        compiler_params=pltpu.CompilerParams(
            dimension_semantics=("parallel",)),
    )(h0, *flat)
    return out[:, :, 0]  # squeeze(1) in NCL == squeeze last in NLC


# ----------------------------------------------------------------------------
# Parameters (deterministic init + eval-mode spectral normalization)
# ----------------------------------------------------------------------------
def init_conv(key, cin, cout, k):
    kw, kb = jax.random.split(key)
    bound = 1.0 / math.sqrt(cin * k)
    w = jax.random.uniform(kw, (k, cin, cout), jnp.float32, -bound, bound)
    b = jax.random.uniform(kb, (1, cout), jnp.float32, -bound, bound)
    # spectral norm (eval mode): divide weight by its largest singular value
    # computed on the torch-layout [cout, cin*k] matrix.
    w2d = jnp.transpose(w, (2, 1, 0)).reshape(cout, cin * k)
    sigma = jnp.linalg.svd(w2d, compute_uv=False)[0]
    return w / sigma, b


def init_params(key, n_layers, in_channels, base_channels, kernel_size):
    assert kernel_size % 2 == 1, "'same' padding assumes odd kernel_size"
    keys = jax.random.split(key, 2 + 5 * n_layers)
    ki = iter(keys)
    params = {"proj_in": init_conv(next(ki), in_channels, base_channels, 1)}
    blocks = []
    ch = base_channels
    for _ in range(n_layers):
        # ResBlock1d(ch -> ch, scale_factor=1): identity shortcut
        blocks.append({
            "conv1": init_conv(next(ki), ch, ch, kernel_size),
            "conv2": init_conv(next(ki), ch, ch, kernel_size),
        })
        # ResBlock1d(ch -> 2*ch, scale_factor=0.5): avgpool + 1x1 shortcut
        blocks.append({
            "conv1": init_conv(next(ki), ch, 2 * ch, kernel_size),
            "conv2": init_conv(next(ki), 2 * ch, 2 * ch, kernel_size),
            "conv_sc": init_conv(next(ki), ch, 2 * ch, 1),
        })
        ch *= 2
    params["blocks"] = blocks
    params["proj_out"] = init_conv(next(ki), ch, 1, 1)
    return params


# ----------------------------------------------------------------------------
if __name__ == "__main__":
    n_layers = 2
    in_channels = 4
    base_channels = 8
    kernel_size = 3
    B, t = 2, 64  # -> T0 = 16, final T = 4, final channels = 32

    key = jax.random.PRNGKey(0)
    k_params, k_x = jax.random.split(key)
    params = init_params(k_params, n_layers, in_channels, base_channels, kernel_size)
    x = jax.random.normal(k_x, (B, t), jnp.float32)

    y = random_window_discriminator(x, params, n_layers=n_layers,
                                    in_channels=in_channels)
    jax.block_until_ready(y)
    assert y.shape == (B, (t // in_channels) // (2 ** n_layers)), y.shape
    print("KERNEL_OK")
</pallas_src>

<mosaic_0001>
module attributes {stable_mosaic.version = 11 : i64} {
  func.func @_fused_forward_kernel(%arg0: i32, %arg1: memref<1x16x4xf32, #tpu.memory_space<vmem>>, %arg2: memref<1x4x8xf32, #tpu.memory_space<vmem>>, %arg3: memref<1x8xf32, #tpu.memory_space<vmem>>, %arg4: memref<3x8x8xf32, #tpu.memory_space<vmem>>, %arg5: memref<1x8xf32, #tpu.memory_space<vmem>>, %arg6: memref<3x8x8xf32, #tpu.memory_space<vmem>>, %arg7: memref<1x8xf32, #tpu.memory_space<vmem>>, %arg8: memref<3x8x16xf32, #tpu.memory_space<vmem>>, %arg9: memref<1x16xf32, #tpu.memory_space<vmem>>, %arg10: memref<3x16x16xf32, #tpu.memory_space<vmem>>, %arg11: memref<1x16xf32, #tpu.memory_space<vmem>>, %arg12: memref<1x8x16xf32, #tpu.memory_space<vmem>>, %arg13: memref<1x16xf32, #tpu.memory_space<vmem>>, %arg14: memref<3x16x16xf32, #tpu.memory_space<vmem>>, %arg15: memref<1x16xf32, #tpu.memory_space<vmem>>, %arg16: memref<3x16x16xf32, #tpu.memory_space<vmem>>, %arg17: memref<1x16xf32, #tpu.memory_space<vmem>>, %arg18: memref<3x16x32xf32, #tpu.memory_space<vmem>>, %arg19: memref<1x32xf32, #tpu.memory_space<vmem>>, %arg20: memref<3x32x32xf32, #tpu.memory_space<vmem>>, %arg21: memref<1x32xf32, #tpu.memory_space<vmem>>, %arg22: memref<1x16x32xf32, #tpu.memory_space<vmem>>, %arg23: memref<1x32xf32, #tpu.memory_space<vmem>>, %arg24: memref<1x32x1xf32, #tpu.memory_space<vmem>>, %arg25: memref<1x1xf32, #tpu.memory_space<vmem>>, %arg26: memref<1x4x1xf32, #tpu.memory_space<vmem>>, %arg27: memref<16x32xf32, #tpu.memory_space<vmem>>) attributes {dimension_semantics = [#tpu.dimension_semantics<parallel>], iteration_bounds = array<i64: 2>, scalar_prefetch = 0 : i64, scratch_operands = 1 : i64, tpu.core_type = #tpu.core_type<tc>, window_params = [{transform_indices = @transform_0, window_bounds = array<i64: 1, 16, 4>}, {pipeline_mode = #tpu.pipeline_mode<synchronous>, transform_indices = @transform_1, window_bounds = array<i64: 1, 4, 8>}, {pipeline_mode = #tpu.pipeline_mode<synchronous>, transform_indices = @transform_2, window_bounds = array<i64: 1, 8>}, {pipeline_mode = #tpu.pipeline_mode<synchronous>, transform_indices = @transform_3, window_bounds = array<i64: 3, 8, 8>}, {pipeline_mode = #tpu.pipeline_mode<synchronous>, transform_indices = @transform_4, window_bounds = array<i64: 1, 8>}, {pipeline_mode = #tpu.pipeline_mode<synchronous>, transform_indices = @transform_5, window_bounds = array<i64: 3, 8, 8>}, {pipeline_mode = #tpu.pipeline_mode<synchronous>, transform_indices = @transform_6, window_bounds = array<i64: 1, 8>}, {pipeline_mode = #tpu.pipeline_mode<synchronous>, transform_indices = @transform_7, window_bounds = array<i64: 3, 8, 16>}, {pipeline_mode = #tpu.pipeline_mode<synchronous>, transform_indices = @transform_8, window_bounds = array<i64: 1, 16>}, {pipeline_mode = #tpu.pipeline_mode<synchronous>, transform_indices = @transform_9, window_bounds = array<i64: 3, 16, 16>}, {pipeline_mode = #tpu.pipeline_mode<synchronous>, transform_indices = @transform_10, window_bounds = array<i64: 1, 16>}, {pipeline_mode = #tpu.pipeline_mode<synchronous>, transform_indices = @transform_11, window_bounds = array<i64: 1, 8, 16>}, {pipeline_mode = #tpu.pipeline_mode<synchronous>, transform_indices = @transform_12, window_bounds = array<i64: 1, 16>}, {pipeline_mode = #tpu.pipeline_mode<synchronous>, transform_indices = @transform_13, window_bounds = array<i64: 3, 16, 16>}, {pipeline_mode = #tpu.pipeline_mode<synchronous>, transform_indices = @transform_14, window_bounds = array<i64: 1, 16>}, {pipeline_mode = #tpu.pipeline_mode<synchronous>, transform_indices = @transform_15, window_bounds = array<i64: 3, 16, 16>}, {pipeline_mode = #tpu.pipeline_mode<synchronous>, transform_indices = @transform_16, window_bounds = array<i64: 1, 16>}, {pipeline_mode = #tpu.pipeline_mode<synchronous>, transform_indices = @transform_17, window_bounds = array<i64: 3, 16, 32>}, {pipeline_mode = #tpu.pipeline_mode<synchronous>, transform_indices = @transform_18, window_bounds = array<i64: 1, 32>}, {pipeline_mode = #tpu.pipeline_mode<synchronous>, transform_indices = @transform_19, window_bounds = array<i64: 3, 32, 32>}, {pipeline_mode = #tpu.pipeline_mode<synchronous>, transform_indices = @transform_20, window_bounds = array<i64: 1, 32>}, {pipeline_mode = #tpu.pipeline_mode<synchronous>, transform_indices = @transform_21, window_bounds = array<i64: 1, 16, 32>}, {pipeline_mode = #tpu.pipeline_mode<synchronous>, transform_indices = @transform_22, window_bounds = array<i64: 1, 32>}, {pipeline_mode = #tpu.pipeline_mode<synchronous>, transform_indices = @transform_23, window_bounds = array<i64: 1, 32, 1>}, {pipeline_mode = #tpu.pipeline_mode<synchronous>, transform_indices = @transform_24, window_bounds = array<i64: 1, 1>}, {transform_indices = @transform_25, window_bounds = array<i64: 1, 4, 1>}]} {
    %c0 = arith.constant 0 : index
    %c0_0 = arith.constant 0 : index
    %c0_1 = arith.constant 0 : index
    %0 = vector.load %arg1[%c0, %c0_0, %c0_1] : memref<1x16x4xf32, #tpu.memory_space<vmem>>, vector<1x16x4xf32>
    %1 = vector.shape_cast %0 : vector<1x16x4xf32> to vector<16x4xf32>
    %cst = arith.constant 0.000000e+00 : f32
    %2 = vector.broadcast %cst : f32 to vector<16x8xf32>
    %c0_2 = arith.constant 0 : index
    %c0_3 = arith.constant 0 : index
    %c0_4 = arith.constant 0 : index
    %3 = vector.load %arg2[%c0_2, %c0_3, %c0_4] : memref<1x4x8xf32, #tpu.memory_space<vmem>>, vector<1x4x8xf32>
    %4 = vector.shape_cast %3 : vector<1x4x8xf32> to vector<4x8xf32>
    %cst_5 = arith.constant dense<0.000000e+00> : vector<16x8xf32>
    %5 = tpu.matmul %1, %4, %cst_5 {dimension_numbers = #tpu.dot_dimension_numbers<[1], [0], [0], [1], [0, 0, 1, 1], [], []>} : vector<16x4xf32>, vector<4x8xf32>, vector<16x8xf32> -> vector<16x8xf32>
    %6 = arith.addf %2, %5 : vector<16x8xf32>
    %c0_6 = arith.constant 0 : index
    %c0_7 = arith.constant 0 : index
    %7 = vector.load %arg3[%c0_6, %c0_7] : memref<1x8xf32, #tpu.memory_space<vmem>>, vector<1x8xf32>
    %8 = vector.broadcast %7 : vector<1x8xf32> to vector<16x8xf32>
    %9 = arith.addf %6, %8 : vector<16x8xf32>
    %cst_8 = arith.constant 0.000000e+00 : f32
    %10 = vector.broadcast %cst_8 : f32 to vector<16x8xf32>
    %11 = arith.cmpf oge, %9, %10 : vector<16x8xf32>
    %cst_9 = arith.constant 2.000000e-01 : f32
    %12 = vector.broadcast %cst_9 : f32 to vector<16x8xf32>
    %13 = arith.mulf %12, %9 : vector<16x8xf32>
    %14 = arith.select %11, %9, %13 : vector<16x8xi1>, vector<16x8xf32>
    %cst_10 = arith.constant 0.000000e+00 : f32
    %15 = vector.broadcast %cst_10 : f32 to vector<1x8xf32>
    %16 = tpu.concatenate %15, %14, %15 in 0 : vector<1x8xf32>, vector<16x8xf32>, vector<1x8xf32> -> vector<18x8xf32>
    %cst_11 = arith.constant 0.000000e+00 : f32
    %17 = vector.broadcast %cst_11 : f32 to vector<16x8xf32>
    %18 = vector.extract_strided_slice %16 {offsets = [0, 0], sizes = [16, 8], strides = [1, 1]} : vector<18x8xf32> to vector<16x8xf32>
    %c0_12 = arith.constant 0 : index
    %c0_13 = arith.constant 0 : index
    %c0_14 = arith.constant 0 : index
    %19 = vector.load %arg4[%c0_12, %c0_13, %c0_14] : memref<3x8x8xf32, #tpu.memory_space<vmem>>, vector<1x8x8xf32>
    %20 = vector.shape_cast %19 : vector<1x8x8xf32> to vector<8x8xf32>
    %cst_15 = arith.constant dense<0.000000e+00> : vector<16x8xf32>
    %21 = tpu.matmul %18, %20, %cst_15 {dimension_numbers = #tpu.dot_dimension_numbers<[1], [0], [0], [1], [0, 0, 1, 1], [], []>} : vector<16x8xf32>, vector<8x8xf32>, vector<16x8xf32> -> vector<16x8xf32>
    %22 = arith.addf %17, %21 : vector<16x8xf32>
    %23 = vector.extract_strided_slice %16 {offsets = [1, 0], sizes = [16, 8], strides = [1, 1]} : vector<18x8xf32> to vector<16x8xf32>
    %c1 = arith.constant 1 : index
    %c0_16 = arith.constant 0 : index
    %c0_17 = arith.constant 0 : index
    %24 = vector.load %arg4[%c1, %c0_16, %c0_17] : memref<3x8x8xf32, #tpu.memory_space<vmem>>, vector<1x8x8xf32>
    %25 = vector.shape_cast %24 : vector<1x8x8xf32> to vector<8x8xf32>
    %cst_18 = arith.constant dense<0.000000e+00> : vector<16x8xf32>
    %26 = tpu.matmul %23, %25, %cst_18 {dimension_numbers = #tpu.dot_dimension_numbers<[1], [0], [0], [1], [0, 0, 1, 1], [], []>} : vector<16x8xf32>, vector<8x8xf32>, vector<16x8xf32> -> vector<16x8xf32>
    %27 = arith.addf %22, %26 : vector<16x8xf32>
    %28 = vector.extract_strided_slice %16 {offsets = [2, 0], sizes = [16, 8], strides = [1, 1]} : vector<18x8xf32> to vector<16x8xf32>
    %c2 = arith.constant 2 : index
    %c0_19 = arith.constant 0 : index
    %c0_20 = arith.constant 0 : index
    %29 = vector.load %arg4[%c2, %c0_19, %c0_20] : memref<3x8x8xf32, #tpu.memory_space<vmem>>, vector<1x8x8xf32>
    %30 = vector.shape_cast %29 : vector<1x8x8xf32> to vector<8x8xf32>
    %cst_21 = arith.constant dense<0.000000e+00> : vector<16x8xf32>
    %31 = tpu.matmul %28, %30, %cst_21 {dimension_numbers = #tpu.dot_dimension_numbers<[1], [0], [0], [1], [0, 0, 1, 1], [], []>} : vector<16x8xf32>, vector<8x8xf32>, vector<16x8xf32> -> vector<16x8xf32>
    %32 = arith.addf %27, %31 : vector<16x8xf32>
    %c0_22 = arith.constant 0 : index
    %c0_23 = arith.constant 0 : index
    %33 = vector.load %arg5[%c0_22, %c0_23] : memref<1x8xf32, #tpu.memory_space<vmem>>, vector<1x8xf32>
    %34 = vector.broadcast %33 : vector<1x8xf32> to vector<16x8xf32>
    %35 = arith.addf %32, %34 : vector<16x8xf32>
    %cst_24 = arith.constant 0.000000e+00 : f32
    %36 = vector.broadcast %cst_24 : f32 to vector<16x8xf32>
    %37 = arith.cmpf oge, %35, %36 : vector<16x8xf32>
    %cst_25 = arith.constant 2.000000e-01 : f32
    %38 = vector.broadcast %cst_25 : f32 to vector<16x8xf32>
    %39 = arith.mulf %38, %35 : vector<16x8xf32>
    %40 = arith.select %37, %35, %39 : vector<16x8xi1>, vector<16x8xf32>
    %cst_26 = arith.constant 0.000000e+00 : f32
    %41 = vector.broadcast %cst_26 : f32 to vector<1x8xf32>
    %42 = tpu.concatenate %41, %40, %41 in 0 : vector<1x8xf32>, vector<16x8xf32>, vector<1x8xf32> -> vector<18x8xf32>
    %cst_27 = arith.constant 0.000000e+00 : f32
    %43 = vector.broadcast %cst_27 : f32 to vector<16x8xf32>
    %44 = vector.extract_strided_slice %42 {offsets = [0, 0], sizes = [16, 8], strides = [1, 1]} : vector<18x8xf32> to vector<16x8xf32>
    %c0_28 = arith.constant 0 : index
    %c0_29 = arith.constant 0 : index
    %c0_30 = arith.constant 0 : index
    %45 = vector.load %arg6[%c0_28, %c0_29, %c0_30] : memref<3x8x8xf32, #tpu.memory_space<vmem>>, vector<1x8x8xf32>
    %46 = vector.shape_cast %45 : vector<1x8x8xf32> to vector<8x8xf32>
    %cst_31 = arith.constant dense<0.000000e+00> : vector<16x8xf32>
    %47 = tpu.matmul %44, %46, %cst_31 {dimension_numbers = #tpu.dot_dimension_numbers<[1], [0], [0], [1], [0, 0, 1, 1], [], []>} : vector<16x8xf32>, vector<8x8xf32>, vector<16x8xf32> -> vector<16x8xf32>
    %48 = arith.addf %43, %47 : vector<16x8xf32>
    %49 = vector.extract_strided_slice %42 {offsets = [1, 0], sizes = [16, 8], strides = [1, 1]} : vector<18x8xf32> to vector<16x8xf32>
    %c1_32 = arith.constant 1 : index
    %c0_33 = arith.constant 0 : index
    %c0_34 = arith.constant 0 : index
    %50 = vector.load %arg6[%c1_32, %c0_33, %c0_34] : memref<3x8x8xf32, #tpu.memory_space<vmem>>, vector<1x8x8xf32>
    %51 = vector.shape_cast %50 : vector<1x8x8xf32> to vector<8x8xf32>
    %cst_35 = arith.constant dense<0.000000e+00> : vector<16x8xf32>
    %52 = tpu.matmul %49, %51, %cst_35 {dimension_numbers = #tpu.dot_dimension_numbers<[1], [0], [0], [1], [0, 0, 1, 1], [], []>} : vector<16x8xf32>, vector<8x8xf32>, vector<16x8xf32> -> vector<16x8xf32>
    %53 = arith.addf %48, %52 : vector<16x8xf32>
    %54 = vector.extract_strided_slice %42 {offsets = [2, 0], sizes = [16, 8], strides = [1, 1]} : vector<18x8xf32> to vector<16x8xf32>
    %c2_36 = arith.constant 2 : index
    %c0_37 = arith.constant 0 : index
    %c0_38 = arith.constant 0 : index
    %55 = vector.load %arg6[%c2_36, %c0_37, %c0_38] : memref<3x8x8xf32, #tpu.memory_space<vmem>>, vector<1x8x8xf32>
    %56 = vector.shape_cast %55 : vector<1x8x8xf32> to vector<8x8xf32>
    %cst_39 = arith.constant dense<0.000000e+00> : vector<16x8xf32>
    %57 = tpu.matmul %54, %56, %cst_39 {dimension_numbers = #tpu.dot_dimension_numbers<[1], [0], [0], [1], [0, 0, 1, 1], [], []>} : vector<16x8xf32>, vector<8x8xf32>, vector<16x8xf32> -> vector<16x8xf32>
    %58 = arith.addf %53, %57 : vector<16x8xf32>
    %c0_40 = arith.constant 0 : index
    %c0_41 = arith.constant 0 : index
    %59 = vector.load %arg7[%c0_40, %c0_41] : memref<1x8xf32, #tpu.memory_space<vmem>>, vector<1x8xf32>
    %60 = vector.broadcast %59 : vector<1x8xf32> to vector<16x8xf32>
    %61 = arith.addf %58, %60 : vector<16x8xf32>
    %62 = arith.addf %9, %61 : vector<16x8xf32>
    %c0_42 = arith.constant 0 : index
    %c0_43 = arith.constant 0 : index
    %63 = vector.load %arg27[%c0_42, %c0_43] : memref<16x32xf32, #tpu.memory_space<vmem>>, vector<16x8xf32>
    tpu.vector_store %arg27[%c0_42, %c0_43], %62 {strides = array<i32>} : memref<16x32xf32, #tpu.memory_space<vmem>>, vector<16x8xf32>,
    %c0_44 = arith.constant 0 : index
    %c0_45 = arith.constant 0 : index
    %64 = tpu.strided_load %arg27[%c0_44, %c0_45] {strides = array<i32: 2, 1>} : memref<16x32xf32, #tpu.memory_space<vmem>>, vector<8x8xf32>
    %c1_46 = arith.constant 1 : index
    %c0_47 = arith.constant 0 : index
    %65 = tpu.strided_load %arg27[%c1_46, %c0_47] {strides = array<i32: 2, 1>} : memref<16x32xf32, #tpu.memory_space<vmem>>, vector<8x8xf32>
    %66 = arith.addf %64, %65 : vector<8x8xf32>
    %cst_48 = arith.constant 5.000000e-01 : f32
    %67 = vector.broadcast %cst_48 : f32 to vector<8x8xf32>
    %68 = arith.mulf %66, %67 : vector<8x8xf32>
    %cst_49 = arith.constant 0.000000e+00 : f32
    %69 = vector.broadcast %cst_49 : f32 to vector<8x16xf32>
    %c0_50 = arith.constant 0 : index
    %c0_51 = arith.constant 0 : index
    %c0_52 = arith.constant 0 : index
    %70 = vector.load %arg12[%c0_50, %c0_51, %c0_52] : memref<1x8x16xf32, #tpu.memory_space<vmem>>, vector<1x8x16xf32>
    %71 = vector.shape_cast %70 : vector<1x8x16xf32> to vector<8x16xf32>
    %cst_53 = arith.constant dense<0.000000e+00> : vector<8x16xf32>
    %72 = tpu.matmul %68, %71, %cst_53 {dimension_numbers = #tpu.dot_dimension_numbers<[1], [0], [0], [1], [0, 0, 1, 1], [], []>} : vector<8x8xf32>, vector<8x16xf32>, vector<8x16xf32> -> vector<8x16xf32>
    %73 = arith.addf %69, %72 : vector<8x16xf32>
    %c0_54 = arith.constant 0 : index
    %c0_55 = arith.constant 0 : index
    %74 = vector.load %arg13[%c0_54, %c0_55] : memref<1x16xf32, #tpu.memory_space<vmem>>, vector<1x16xf32>
    %75 = vector.broadcast %74 : vector<1x16xf32> to vector<8x16xf32>
    %76 = arith.addf %73, %75 : vector<8x16xf32>
    %cst_56 = arith.constant 0.000000e+00 : f32
    %77 = vector.broadcast %cst_56 : f32 to vector<16x8xf32>
    %78 = arith.cmpf oge, %62, %77 : vector<16x8xf32>
    %cst_57 = arith.constant 2.000000e-01 : f32
    %79 = vector.broadcast %cst_57 : f32 to vector<16x8xf32>
    %80 = arith.mulf %79, %62 : vector<16x8xf32>
    %81 = arith.select %78, %62, %80 : vector<16x8xi1>, vector<16x8xf32>
    %cst_58 = arith.constant 0.000000e+00 : f32
    %82 = vector.broadcast %cst_58 : f32 to vector<1x8xf32>
    %83 = tpu.concatenate %82, %81, %82 in 0 : vector<1x8xf32>, vector<16x8xf32>, vector<1x8xf32> -> vector<18x8xf32>
    %cst_59 = arith.constant 0.000000e+00 : f32
    %84 = vector.broadcast %cst_59 : f32 to vector<16x16xf32>
    %85 = vector.extract_strided_slice %83 {offsets = [0, 0], sizes = [16, 8], strides = [1, 1]} : vector<18x8xf32> to vector<16x8xf32>
    %c0_60 = arith.constant 0 : index
    %c0_61 = arith.constant 0 : index
    %c0_62 = arith.constant 0 : index
    %86 = vector.load %arg8[%c0_60, %c0_61, %c0_62] : memref<3x8x16xf32, #tpu.memory_space<vmem>>, vector<1x8x16xf32>
    %87 = vector.shape_cast %86 : vector<1x8x16xf32> to vector<8x16xf32>
    %cst_63 = arith.constant dense<0.000000e+00> : vector<16x16xf32>
    %88 = tpu.matmul %85, %87, %cst_63 {dimension_numbers = #tpu.dot_dimension_numbers<[1], [0], [0], [1], [0, 0, 1, 1], [], []>} : vector<16x8xf32>, vector<8x16xf32>, vector<16x16xf32> -> vector<16x16xf32>
    %89 = arith.addf %84, %88 : vector<16x16xf32>
    %90 = vector.extract_strided_slice %83 {offsets = [1, 0], sizes = [16, 8], strides = [1, 1]} : vector<18x8xf32> to vector<16x8xf32>
    %c1_64 = arith.constant 1 : index
    %c0_65 = arith.constant 0 : index
    %c0_66 = arith.constant 0 : index
    %91 = vector.load %arg8[%c1_64, %c0_65, %c0_66] : memref<3x8x16xf32, #tpu.memory_space<vmem>>, vector<1x8x16xf32>
    %92 = vector.shape_cast %91 : vector<1x8x16xf32> to vector<8x16xf32>
    %cst_67 = arith.constant dense<0.000000e+00> : vector<16x16xf32>
    %93 = tpu.matmul %90, %92, %cst_67 {dimension_numbers = #tpu.dot_dimension_numbers<[1], [0], [0], [1], [0, 0, 1, 1], [], []>} : vector<16x8xf32>, vector<8x16xf32>, vector<16x16xf32> -> vector<16x16xf32>
    %94 = arith.addf %89, %93 : vector<16x16xf32>
    %95 = vector.extract_strided_slice %83 {offsets = [2, 0], sizes = [16, 8], strides = [1, 1]} : vector<18x8xf32> to vector<16x8xf32>
    %c2_68 = arith.constant 2 : index
    %c0_69 = arith.constant 0 : index
    %c0_70 = arith.constant 0 : index
    %96 = vector.load %arg8[%c2_68, %c0_69, %c0_70] : memref<3x8x16xf32, #tpu.memory_space<vmem>>, vector<1x8x16xf32>
    %97 = vector.shape_cast %96 : vector<1x8x16xf32> to vector<8x16xf32>
    %cst_71 = arith.constant dense<0.000000e+00> : vector<16x16xf32>
    %98 = tpu.matmul %95, %97, %cst_71 {dimension_numbers = #tpu.dot_dimension_numbers<[1], [0], [0], [1], [0, 0, 1, 1], [], []>} : vector<16x8xf32>, vector<8x16xf32>, vector<16x16xf32> -> vector<16x16xf32>
    %99 = arith.addf %94, %98 : vector<16x16xf32>
    %c0_72 = arith.constant 0 : index
    %c0_73 = arith.constant 0 : index
    %100 = vector.load %arg9[%c0_72, %c0_73] : memref<1x16xf32, #tpu.memory_space<vmem>>, vector<1x16xf32>
    %101 = vector.broadcast %100 : vector<1x16xf32> to vector<16x16xf32>
    %102 = arith.addf %99, %101 : vector<16x16xf32>
    %c0_74 = arith.constant 0 : index
    %c0_75 = arith.constant 0 : index
    %103 = vector.load %arg27[%c0_74, %c0_75] : memref<16x32xf32, #tpu.memory_space<vmem>>, vector<16x16xf32>
    tpu.vector_store %arg27[%c0_74, %c0_75], %102 {strides = array<i32>} : memref<16x32xf32, #tpu.memory_space<vmem>>, vector<16x16xf32>,
    %c0_76 = arith.constant 0 : index
    %c0_77 = arith.constant 0 : index
    %104 = tpu.strided_load %arg27[%c0_76, %c0_77] {strides = array<i32: 2, 1>} : memref<16x32xf32, #tpu.memory_space<vmem>>, vector<8x16xf32>
    %c1_78 = arith.constant 1 : index
    %c0_79 = arith.constant 0 : index
    %105 = tpu.strided_load %arg27[%c1_78, %c0_79] {strides = array<i32: 2, 1>} : memref<16x32xf32, #tpu.memory_space<vmem>>, vector<8x16xf32>
    %106 = arith.addf %104, %105 : vector<8x16xf32>
    %cst_80 = arith.constant 5.000000e-01 : f32
    %107 = vector.broadcast %cst_80 : f32 to vector<8x16xf32>
    %108 = arith.mulf %106, %107 : vector<8x16xf32>
    %cst_81 = arith.constant 0.000000e+00 : f32
    %109 = vector.broadcast %cst_81 : f32 to vector<8x16xf32>
    %110 = arith.cmpf oge, %108, %109 : vector<8x16xf32>
    %cst_82 = arith.constant 2.000000e-01 : f32
    %111 = vector.broadcast %cst_82 : f32 to vector<8x16xf32>
    %112 = arith.mulf %111, %108 : vector<8x16xf32>
    %113 = arith.select %110, %108, %112 : vector<8x16xi1>, vector<8x16xf32>
    %cst_83 = arith.constant 0.000000e+00 : f32
    %114 = vector.broadcast %cst_83 : f32 to vector<1x16xf32>
    %115 = tpu.concatenate %114, %113, %114 in 0 : vector<1x16xf32>, vector<8x16xf32>, vector<1x16xf32> -> vector<10x16xf32>
    %cst_84 = arith.constant 0.000000e+00 : f32
    %116 = vector.broadcast %cst_84 : f32 to vector<8x16xf32>
    %117 = vector.extract_strided_slice %115 {offsets = [0, 0], sizes = [8, 16], strides = [1, 1]} : vector<10x16xf32> to vector<8x16xf32>
    %c0_85 = arith.constant 0 : index
    %c0_86 = arith.constant 0 : index
    %c0_87 = arith.constant 0 : index
    %118 = vector.load %arg10[%c0_85, %c0_86, %c0_87] : memref<3x16x16xf32, #tpu.memory_space<vmem>>, vector<1x16x16xf32>
    %119 = vector.shape_cast %118 : vector<1x16x16xf32> to vector<16x16xf32>
    %cst_88 = arith.constant dense<0.000000e+00> : vector<8x16xf32>
    %120 = tpu.matmul %117, %119, %cst_88 {dimension_numbers = #tpu.dot_dimension_numbers<[1], [0], [0], [1], [0, 0, 1, 1], [], []>} : vector<8x16xf32>, vector<16x16xf32>, vector<8x16xf32> -> vector<8x16xf32>
    %121 = arith.addf %116, %120 : vector<8x16xf32>
    %122 = vector.extract_strided_slice %115 {offsets = [1, 0], sizes = [8, 16], strides = [1, 1]} : vector<10x16xf32> to vector<8x16xf32>
    %c1_89 = arith.constant 1 : index
    %c0_90 = arith.constant 0 : index
    %c0_91 = arith.constant 0 : index
    %123 = vector.load %arg10[%c1_89, %c0_90, %c0_91] : memref<3x16x16xf32, #tpu.memory_space<vmem>>, vector<1x16x16xf32>
    %124 = vector.shape_cast %123 : vector<1x16x16xf32> to vector<16x16xf32>
    %cst_92 = arith.constant dense<0.000000e+00> : vector<8x16xf32>
    %125 = tpu.matmul %122, %124, %cst_92 {dimension_numbers = #tpu.dot_dimension_numbers<[1], [0], [0], [1], [0, 0, 1, 1], [], []>} : vector<8x16xf32>, vector<16x16xf32>, vector<8x16xf32> -> vector<8x16xf32>
    %126 = arith.addf %121, %125 : vector<8x16xf32>
    %127 = vector.extract_strided_slice %115 {offsets = [2, 0], sizes = [8, 16], strides = [1, 1]} : vector<10x16xf32> to vector<8x16xf32>
    %c2_93 = arith.constant 2 : index
    %c0_94 = arith.constant 0 : index
    %c0_95 = arith.constant 0 : index
    %128 = vector.load %arg10[%c2_93, %c0_94, %c0_95] : memref<3x16x16xf32, #tpu.memory_space<vmem>>, vector<1x16x16xf32>
    %129 = vector.shape_cast %128 : vector<1x16x16xf32> to vector<16x16xf32>
    %cst_96 = arith.constant dense<0.000000e+00> : vector<8x16xf32>
    %130 = tpu.matmul %127, %129, %cst_96 {dimension_numbers = #tpu.dot_dimension_numbers<[1], [0], [0], [1], [0, 0, 1, 1], [], []>} : vector<8x16xf32>, vector<16x16xf32>, vector<8x16xf32> -> vector<8x16xf32>
    %131 = arith.addf %126, %130 : vector<8x16xf32>
    %c0_97 = arith.constant 0 : index
    %c0_98 = arith.constant 0 : index
    %132 = vector.load %arg11[%c0_97, %c0_98] : memref<1x16xf32, #tpu.memory_space<vmem>>, vector<1x16xf32>
    %133 = vector.broadcast %132 : vector<1x16xf32> to vector<8x16xf32>
    %134 = arith.addf %131, %133 : vector<8x16xf32>
    %135 = arith.addf %76, %134 : vector<8x16xf32>
    %cst_99 = arith.constant 0.000000e+00 : f32
    %136 = vector.broadcast %cst_99 : f32 to vector<8x16xf32>
    %137 = arith.cmpf oge, %135, %136 : vector<8x16xf32>
    %cst_100 = arith.constant 2.000000e-01 : f32
    %138 = vector.broadcast %cst_100 : f32 to vector<8x16xf32>
    %139 = arith.mulf %138, %135 : vector<8x16xf32>
    %140 = arith.select %137, %135, %139 : vector<8x16xi1>, vector<8x16xf32>
    %cst_101 = arith.constant 0.000000e+00 : f32
    %141 = vector.broadcast %cst_101 : f32 to vector<1x16xf32>
    %142 = tpu.concatenate %141, %140, %141 in 0 : vector<1x16xf32>, vector<8x16xf32>, vector<1x16xf32> -> vector<10x16xf32>
    %cst_102 = arith.constant 0.000000e+00 : f32
    %143 = vector.broadcast %cst_102 : f32 to vector<8x16xf32>
    %144 = vector.extract_strided_slice %142 {offsets = [0, 0], sizes = [8, 16], strides = [1, 1]} : vector<10x16xf32> to vector<8x16xf32>
    %c0_103 = arith.constant 0 : index
    %c0_104 = arith.constant 0 : index
    %c0_105 = arith.constant 0 : index
    %145 = vector.load %arg14[%c0_103, %c0_104, %c0_105] : memref<3x16x16xf32, #tpu.memory_space<vmem>>, vector<1x16x16xf32>
    %146 = vector.shape_cast %145 : vector<1x16x16xf32> to vector<16x16xf32>
    %cst_106 = arith.constant dense<0.000000e+00> : vector<8x16xf32>
    %147 = tpu.matmul %144, %146, %cst_106 {dimension_numbers = #tpu.dot_dimension_numbers<[1], [0], [0], [1], [0, 0, 1, 1], [], []>} : vector<8x16xf32>, vector<16x16xf32>, vector<8x16xf32> -> vector<8x16xf32>
    %148 = arith.addf %143, %147 : vector<8x16xf32>
    %149 = vector.extract_strided_slice %142 {offsets = [1, 0], sizes = [8, 16], strides = [1, 1]} : vector<10x16xf32> to vector<8x16xf32>
    %c1_107 = arith.constant 1 : index
    %c0_108 = arith.constant 0 : index
    %c0_109 = arith.constant 0 : index
    %150 = vector.load %arg14[%c1_107, %c0_108, %c0_109] : memref<3x16x16xf32, #tpu.memory_space<vmem>>, vector<1x16x16xf32>
    %151 = vector.shape_cast %150 : vector<1x16x16xf32> to vector<16x16xf32>
    %cst_110 = arith.constant dense<0.000000e+00> : vector<8x16xf32>
    %152 = tpu.matmul %149, %151, %cst_110 {dimension_numbers = #tpu.dot_dimension_numbers<[1], [0], [0], [1], [0, 0, 1, 1], [], []>} : vector<8x16xf32>, vector<16x16xf32>, vector<8x16xf32> -> vector<8x16xf32>
    %153 = arith.addf %148, %152 : vector<8x16xf32>
    %154 = vector.extract_strided_slice %142 {offsets = [2, 0], sizes = [8, 16], strides = [1, 1]} : vector<10x16xf32> to vector<8x16xf32>
    %c2_111 = arith.constant 2 : index
    %c0_112 = arith.constant 0 : index
    %c0_113 = arith.constant 0 : index
    %155 = vector.load %arg14[%c2_111, %c0_112, %c0_113] : memref<3x16x16xf32, #tpu.memory_space<vmem>>, vector<1x16x16xf32>
    %156 = vector.shape_cast %155 : vector<1x16x16xf32> to vector<16x16xf32>
    %cst_114 = arith.constant dense<0.000000e+00> : vector<8x16xf32>
    %157 = tpu.matmul %154, %156, %cst_114 {dimension_numbers = #tpu.dot_dimension_numbers<[1], [0], [0], [1], [0, 0, 1, 1], [], []>} : vector<8x16xf32>, vector<16x16xf32>, vector<8x16xf32> -> vector<8x16xf32>
    %158 = arith.addf %153, %157 : vector<8x16xf32>
    %c0_115 = arith.constant 0 : index
    %c0_116 = arith.constant 0 : index
    %159 = vector.load %arg15[%c0_115, %c0_116] : memref<1x16xf32, #tpu.memory_space<vmem>>, vector<1x16xf32>
    %160 = vector.broadcast %159 : vector<1x16xf32> to vector<8x16xf32>
    %161 = arith.addf %158, %160 : vector<8x16xf32>
    %cst_117 = arith.constant 0.000000e+00 : f32
    %162 = vector.broadcast %cst_117 : f32 to vector<8x16xf32>
    %163 = arith.cmpf oge, %161, %162 : vector<8x16xf32>
    %cst_118 = arith.constant 2.000000e-01 : f32
    %164 = vector.broadcast %cst_118 : f32 to vector<8x16xf32>
    %165 = arith.mulf %164, %161 : vector<8x16xf32>
    %166 = arith.select %163, %161, %165 : vector<8x16xi1>, vector<8x16xf32>
    %cst_119 = arith.constant 0.000000e+00 : f32
    %167 = vector.broadcast %cst_119 : f32 to vector<1x16xf32>
    %168 = tpu.concatenate %167, %166, %167 in 0 : vector<1x16xf32>, vector<8x16xf32>, vector<1x16xf32> -> vector<10x16xf32>
    %cst_120 = arith.constant 0.000000e+00 : f32
    %169 = vector.broadcast %cst_120 : f32 to vector<8x16xf32>
    %170 = vector.extract_strided_slice %168 {offsets = [0, 0], sizes = [8, 16], strides = [1, 1]} : vector<10x16xf32> to vector<8x16xf32>
    %c0_121 = arith.constant 0 : index
    %c0_122 = arith.constant 0 : index
    %c0_123 = arith.constant 0 : index
    %171 = vector.load %arg16[%c0_121, %c0_122, %c0_123] : memref<3x16x16xf32, #tpu.memory_space<vmem>>, vector<1x16x16xf32>
    %172 = vector.shape_cast %171 : vector<1x16x16xf32> to vector<16x16xf32>
    %cst_124 = arith.constant dense<0.000000e+00> : vector<8x16xf32>
    %173 = tpu.matmul %170, %172, %cst_124 {dimension_numbers = #tpu.dot_dimension_numbers<[1], [0], [0], [1], [0, 0, 1, 1], [], []>} : vector<8x16xf32>, vector<16x16xf32>, vector<8x16xf32> -> vector<8x16xf32>
    %174 = arith.addf %169, %173 : vector<8x16xf32>
    %175 = vector.extract_strided_slice %168 {offsets = [1, 0], sizes = [8, 16], strides = [1, 1]} : vector<10x16xf32> to vector<8x16xf32>
    %c1_125 = arith.constant 1 : index
    %c0_126 = arith.constant 0 : index
    %c0_127 = arith.constant 0 : index
    %176 = vector.load %arg16[%c1_125, %c0_126, %c0_127] : memref<3x16x16xf32, #tpu.memory_space<vmem>>, vector<1x16x16xf32>
    %177 = vector.shape_cast %176 : vector<1x16x16xf32> to vector<16x16xf32>
    %cst_128 = arith.constant dense<0.000000e+00> : vector<8x16xf32>
    %178 = tpu.matmul %175, %177, %cst_128 {dimension_numbers = #tpu.dot_dimension_numbers<[1], [0], [0], [1], [0, 0, 1, 1], [], []>} : vector<8x16xf32>, vector<16x16xf32>, vector<8x16xf32> -> vector<8x16xf32>
    %179 = arith.addf %174, %178 : vector<8x16xf32>
    %180 = vector.extract_strided_slice %168 {offsets = [2, 0], sizes = [8, 16], strides = [1, 1]} : vector<10x16xf32> to vector<8x16xf32>
    %c2_129 = arith.constant 2 : index
    %c0_130 = arith.constant 0 : index
    %c0_131 = arith.constant 0 : index
    %181 = vector.load %arg16[%c2_129, %c0_130, %c0_131] : memref<3x16x16xf32, #tpu.memory_space<vmem>>, vector<1x16x16xf32>
    %182 = vector.shape_cast %181 : vector<1x16x16xf32> to vector<16x16xf32>
    %cst_132 = arith.constant dense<0.000000e+00> : vector<8x16xf32>
    %183 = tpu.matmul %180, %182, %cst_132 {dimension_numbers = #tpu.dot_dimension_numbers<[1], [0], [0], [1], [0, 0, 1, 1], [], []>} : vector<8x16xf32>, vector<16x16xf32>, vector<8x16xf32> -> vector<8x16xf32>
    %184 = arith.addf %179, %183 : vector<8x16xf32>
    %c0_133 = arith.constant 0 : index
    %c0_134 = arith.constant 0 : index
    %185 = vector.load %arg17[%c0_133, %c0_134] : memref<1x16xf32, #tpu.memory_space<vmem>>, vector<1x16xf32>
    %186 = vector.broadcast %185 : vector<1x16xf32> to vector<8x16xf32>
    %187 = arith.addf %184, %186 : vector<8x16xf32>
    %188 = arith.addf %135, %187 : vector<8x16xf32>
    %c0_135 = arith.constant 0 : index
    %c0_136 = arith.constant 0 : index
    %189 = vector.load %arg27[%c0_135, %c0_136] : memref<16x32xf32, #tpu.memory_space<vmem>>, vector<8x16xf32>
    tpu.vector_store %arg27[%c0_135, %c0_136], %188 {strides = array<i32>} : memref<16x32xf32, #tpu.memory_space<vmem>>, vector<8x16xf32>,
    %c0_137 = arith.constant 0 : index
    %c0_138 = arith.constant 0 : index
    %190 = tpu.strided_load %arg27[%c0_137, %c0_138] {strides = array<i32: 2, 1>} : memref<16x32xf32, #tpu.memory_space<vmem>>, vector<4x16xf32>
    %c1_139 = arith.constant 1 : index
    %c0_140 = arith.constant 0 : index
    %191 = tpu.strided_load %arg27[%c1_139, %c0_140] {strides = array<i32: 2, 1>} : memref<16x32xf32, #tpu.memory_space<vmem>>, vector<4x16xf32>
    %192 = arith.addf %190, %191 : vector<4x16xf32>
    %cst_141 = arith.constant 5.000000e-01 : f32
    %193 = vector.broadcast %cst_141 : f32 to vector<4x16xf32>
    %194 = arith.mulf %192, %193 : vector<4x16xf32>
    %cst_142 = arith.constant 0.000000e+00 : f32
    %195 = vector.broadcast %cst_142 : f32 to vector<4x32xf32>
    %c0_143 = arith.constant 0 : index
    %c0_144 = arith.constant 0 : index
    %c0_145 = arith.constant 0 : index
    %196 = vector.load %arg22[%c0_143, %c0_144, %c0_145] : memref<1x16x32xf32, #tpu.memory_space<vmem>>, vector<1x16x32xf32>
    %197 = vector.shape_cast %196 : vector<1x16x32xf32> to vector<16x32xf32>
    %cst_146 = arith.constant dense<0.000000e+00> : vector<4x32xf32>
    %198 = tpu.matmul %194, %197, %cst_146 {dimension_numbers = #tpu.dot_dimension_numbers<[1], [0], [0], [1], [0, 0, 1, 1], [], []>} : vector<4x16xf32>, vector<16x32xf32>, vector<4x32xf32> -> vector<4x32xf32>
    %199 = arith.addf %195, %198 : vector<4x32xf32>
    %c0_147 = arith.constant 0 : index
    %c0_148 = arith.constant 0 : index
    %200 = vector.load %arg23[%c0_147, %c0_148] : memref<1x32xf32, #tpu.memory_space<vmem>>, vector<1x32xf32>
    %201 = vector.broadcast %200 : vector<1x32xf32> to vector<4x32xf32>
    %202 = arith.addf %199, %201 : vector<4x32xf32>
    %cst_149 = arith.constant 0.000000e+00 : f32
    %203 = vector.broadcast %cst_149 : f32 to vector<8x16xf32>
    %204 = arith.cmpf oge, %188, %203 : vector<8x16xf32>
    %cst_150 = arith.constant 2.000000e-01 : f32
    %205 = vector.broadcast %cst_150 : f32 to vector<8x16xf32>
    %206 = arith.mulf %205, %188 : vector<8x16xf32>
    %207 = arith.select %204, %188, %206 : vector<8x16xi1>, vector<8x16xf32>
    %cst_151 = arith.constant 0.000000e+00 : f32
    %208 = vector.broadcast %cst_151 : f32 to vector<1x16xf32>
    %209 = tpu.concatenate %208, %207, %208 in 0 : vector<1x16xf32>, vector<8x16xf32>, vector<1x16xf32> -> vector<10x16xf32>
    %cst_152 = arith.constant 0.000000e+00 : f32
    %210 = vector.broadcast %cst_152 : f32 to vector<8x32xf32>
    %211 = vector.extract_strided_slice %209 {offsets = [0, 0], sizes = [8, 16], strides = [1, 1]} : vector<10x16xf32> to vector<8x16xf32>
    %c0_153 = arith.constant 0 : index
    %c0_154 = arith.constant 0 : index
    %c0_155 = arith.constant 0 : index
    %212 = vector.load %arg18[%c0_153, %c0_154, %c0_155] : memref<3x16x32xf32, #tpu.memory_space<vmem>>, vector<1x16x32xf32>
    %213 = vector.shape_cast %212 : vector<1x16x32xf32> to vector<16x32xf32>
    %cst_156 = arith.constant dense<0.000000e+00> : vector<8x32xf32>
    %214 = tpu.matmul %211, %213, %cst_156 {dimension_numbers = #tpu.dot_dimension_numbers<[1], [0], [0], [1], [0, 0, 1, 1], [], []>} : vector<8x16xf32>, vector<16x32xf32>, vector<8x32xf32> -> vector<8x32xf32>
    %215 = arith.addf %210, %214 : vector<8x32xf32>
    %216 = vector.extract_strided_slice %209 {offsets = [1, 0], sizes = [8, 16], strides = [1, 1]} : vector<10x16xf32> to vector<8x16xf32>
    %c1_157 = arith.constant 1 : index
    %c0_158 = arith.constant 0 : index
    %c0_159 = arith.constant 0 : index
    %217 = vector.load %arg18[%c1_157, %c0_158, %c0_159] : memref<3x16x32xf32, #tpu.memory_space<vmem>>, vector<1x16x32xf32>
    %218 = vector.shape_cast %217 : vector<1x16x32xf32> to vector<16x32xf32>
    %cst_160 = arith.constant dense<0.000000e+00> : vector<8x32xf32>
    %219 = tpu.matmul %216, %218, %cst_160 {dimension_numbers = #tpu.dot_dimension_numbers<[1], [0], [0], [1], [0, 0, 1, 1], [], []>} : vector<8x16xf32>, vector<16x32xf32>, vector<8x32xf32> -> vector<8x32xf32>
    %220 = arith.addf %215, %219 : vector<8x32xf32>
    %221 = vector.extract_strided_slice %209 {offsets = [2, 0], sizes = [8, 16], strides = [1, 1]} : vector<10x16xf32> to vector<8x16xf32>
    %c2_161 = arith.constant 2 : index
    %c0_162 = arith.constant 0 : index
    %c0_163 = arith.constant 0 : index
    %222 = vector.load %arg18[%c2_161, %c0_162, %c0_163] : memref<3x16x32xf32, #tpu.memory_space<vmem>>, vector<1x16x32xf32>
    %223 = vector.shape_cast %222 : vector<1x16x32xf32> to vector<16x32xf32>
    %cst_164 = arith.constant dense<0.000000e+00> : vector<8x32xf32>
    %224 = tpu.matmul %221, %223, %cst_164 {dimension_numbers = #tpu.dot_dimension_numbers<[1], [0], [0], [1], [0, 0, 1, 1], [], []>} : vector<8x16xf32>, vector<16x32xf32>, vector<8x32xf32> -> vector<8x32xf32>
    %225 = arith.addf %220, %224 : vector<8x32xf32>
    %c0_165 = arith.constant 0 : index
    %c0_166 = arith.constant 0 : index
    %226 = vector.load %arg19[%c0_165, %c0_166] : memref<1x32xf32, #tpu.memory_space<vmem>>, vector<1x32xf32>
    %227 = vector.broadcast %226 : vector<1x32xf32> to vector<8x32xf32>
    %228 = arith.addf %225, %227 : vector<8x32xf32>
    %c0_167 = arith.constant 0 : index
    %c0_168 = arith.constant 0 : index
    %229 = vector.load %arg27[%c0_167, %c0_168] : memref<16x32xf32, #tpu.memory_space<vmem>>, vector<8x32xf32>
    tpu.vector_store %arg27[%c0_167, %c0_168], %228 {strides = array<i32>} : memref<16x32xf32, #tpu.memory_space<vmem>>, vector<8x32xf32>,
    %c0_169 = arith.constant 0 : index
    %c0_170 = arith.constant 0 : index
    %230 = tpu.strided_load %arg27[%c0_169, %c0_170] {strides = array<i32: 2, 1>} : memref<16x32xf32, #tpu.memory_space<vmem>>, vector<4x32xf32>
    %c1_171 = arith.constant 1 : index
    %c0_172 = arith.constant 0 : index
    %231 = tpu.strided_load %arg27[%c1_171, %c0_172] {strides = array<i32: 2, 1>} : memref<16x32xf32, #tpu.memory_space<vmem>>, vector<4x32xf32>
    %232 = arith.addf %230, %231 : vector<4x32xf32>
    %cst_173 = arith.constant 5.000000e-01 : f32
    %233 = vector.broadcast %cst_173 : f32 to vector<4x32xf32>
    %234 = arith.mulf %232, %233 : vector<4x32xf32>
    %cst_174 = arith.constant 0.000000e+00 : f32
    %235 = vector.broadcast %cst_174 : f32 to vector<4x32xf32>
    %236 = arith.cmpf oge, %234, %235 : vector<4x32xf32>
    %cst_175 = arith.constant 2.000000e-01 : f32
    %237 = vector.broadcast %cst_175 : f32 to vector<4x32xf32>
    %238 = arith.mulf %237, %234 : vector<4x32xf32>
    %239 = arith.select %236, %234, %238 : vector<4x32xi1>, vector<4x32xf32>
    %cst_176 = arith.constant 0.000000e+00 : f32
    %240 = vector.broadcast %cst_176 : f32 to vector<1x32xf32>
    %241 = tpu.concatenate %240, %239, %240 in 0 : vector<1x32xf32>, vector<4x32xf32>, vector<1x32xf32> -> vector<6x32xf32>
    %cst_177 = arith.constant 0.000000e+00 : f32
    %242 = vector.broadcast %cst_177 : f32 to vector<4x32xf32>
    %243 = vector.extract_strided_slice %241 {offsets = [0, 0], sizes = [4, 32], strides = [1, 1]} : vector<6x32xf32> to vector<4x32xf32>
    %c0_178 = arith.constant 0 : index
    %c0_179 = arith.constant 0 : index
    %c0_180 = arith.constant 0 : index
    %244 = vector.load %arg20[%c0_178, %c0_179, %c0_180] : memref<3x32x32xf32, #tpu.memory_space<vmem>>, vector<1x32x32xf32>
    %245 = vector.shape_cast %244 : vector<1x32x32xf32> to vector<32x32xf32>
    %cst_181 = arith.constant dense<0.000000e+00> : vector<4x32xf32>
    %246 = tpu.matmul %243, %245, %cst_181 {dimension_numbers = #tpu.dot_dimension_numbers<[1], [0], [0], [1], [0, 0, 1, 1], [], []>} : vector<4x32xf32>, vector<32x32xf32>, vector<4x32xf32> -> vector<4x32xf32>
    %247 = arith.addf %242, %246 : vector<4x32xf32>
    %248 = vector.extract_strided_slice %241 {offsets = [1, 0], sizes = [4, 32], strides = [1, 1]} : vector<6x32xf32> to vector<4x32xf32>
    %c1_182 = arith.constant 1 : index
    %c0_183 = arith.constant 0 : index
    %c0_184 = arith.constant 0 : index
    %249 = vector.load %arg20[%c1_182, %c0_183, %c0_184] : memref<3x32x32xf32, #tpu.memory_space<vmem>>, vector<1x32x32xf32>
    %250 = vector.shape_cast %249 : vector<1x32x32xf32> to vector<32x32xf32>
    %cst_185 = arith.constant dense<0.000000e+00> : vector<4x32xf32>
    %251 = tpu.matmul %248, %250, %cst_185 {dimension_numbers = #tpu.dot_dimension_numbers<[1], [0], [0], [1], [0, 0, 1, 1], [], []>} : vector<4x32xf32>, vector<32x32xf32>, vector<4x32xf32> -> vector<4x32xf32>
    %252 = arith.addf %247, %251 : vector<4x32xf32>
    %253 = vector.extract_strided_slice %241 {offsets = [2, 0], sizes = [4, 32], strides = [1, 1]} : vector<6x32xf32> to vector<4x32xf32>
    %c2_186 = arith.constant 2 : index
    %c0_187 = arith.constant 0 : index
    %c0_188 = arith.constant 0 : index
    %254 = vector.load %arg20[%c2_186, %c0_187, %c0_188] : memref<3x32x32xf32, #tpu.memory_space<vmem>>, vector<1x32x32xf32>
    %255 = vector.shape_cast %254 : vector<1x32x32xf32> to vector<32x32xf32>
    %cst_189 = arith.constant dense<0.000000e+00> : vector<4x32xf32>
    %256 = tpu.matmul %253, %255, %cst_189 {dimension_numbers = #tpu.dot_dimension_numbers<[1], [0], [0], [1], [0, 0, 1, 1], [], []>} : vector<4x32xf32>, vector<32x32xf32>, vector<4x32xf32> -> vector<4x32xf32>
    %257 = arith.addf %252, %256 : vector<4x32xf32>
    %c0_190 = arith.constant 0 : index
    %c0_191 = arith.constant 0 : index
    %258 = vector.load %arg21[%c0_190, %c0_191] : memref<1x32xf32, #tpu.memory_space<vmem>>, vector<1x32xf32>
    %259 = vector.broadcast %258 : vector<1x32xf32> to vector<4x32xf32>
    %260 = arith.addf %257, %259 : vector<4x32xf32>
    %261 = arith.addf %202, %260 : vector<4x32xf32>
    %cst_192 = arith.constant 0.000000e+00 : f32
    %262 = vector.broadcast %cst_192 : f32 to vector<4x1xf32>
    %c0_193 = arith.constant 0 : index
    %c0_194 = arith.constant 0 : index
    %c0_195 = arith.constant 0 : index
    %263 = vector.load %arg24[%c0_193, %c0_194, %c0_195] : memref<1x32x1xf32, #tpu.memory_space<vmem>>, vector<1x32x1xf32>
    %264 = vector.shape_cast %263 : vector<1x32x1xf32> to vector<32x1xf32>
    %cst_196 = arith.constant dense<0.000000e+00> : vector<4x1xf32>
    %265 = tpu.matmul %261, %264, %cst_196 {dimension_numbers = #tpu.dot_dimension_numbers<[1], [0], [0], [1], [0, 0, 1, 1], [], []>} : vector<4x32xf32>, vector<32x1xf32>, vector<4x1xf32> -> vector<4x1xf32>
    %266 = arith.addf %262, %265 : vector<4x1xf32>
    %c0_197 = arith.constant 0 : index
    %c0_198 = arith.constant 0 : index
    %267 = vector.load %arg25[%c0_197, %c0_198] : memref<1x1xf32, #tpu.memory_space<vmem>>, vector<1x1xf32>
    %268 = vector.broadcast %267 : vector<1x1xf32> to vector<4x1xf32>
    %269 = arith.addf %266, %268 : vector<4x1xf32>
    %c0_199 = arith.constant 0 : index
    %c0_200 = arith.constant 0 : index
    %c0_201 = arith.constant 0 : index
    %270 = vector.load %arg26[%c0_199, %c0_200, %c0_201] : memref<1x4x1xf32, #tpu.memory_space<vmem>>, vector<1x4x1xf32>
    %271 = vector.shape_cast %270 : vector<1x4x1xf32> to vector<4x1xf32>
    %272 = vector.shape_cast %269 : vector<4x1xf32> to vector<1x4x1xf32>
    tpu.vector_store %arg26[%c0_199, %c0_200, %c0_201], %272 {strides = array<i32>} : memref<1x4x1xf32, #tpu.memory_space<vmem>>, vector<1x4x1xf32>,
    return
  }
  func.func @transform_0(%arg0: i32) -> (i32, i32, i32) {
    %c0_i32 = arith.constant 0 : i32
    %c0_i32_0 = arith.constant 0 : i32
    %c0_i32_1 = arith.constant 0 : i32
    return %arg0, %c0_i32, %c0_i32_0 : i32, i32, i32
  }
  func.func @transform_1(%arg0: i32) -> (i32, i32, i32) {
    %c0_i32 = arith.constant 0 : i32
    %c0_i32_0 = arith.constant 0 : i32
    %c0_i32_1 = arith.constant 0 : i32
    %c0_i32_2 = arith.constant 0 : i32
    return %c0_i32, %c0_i32_0, %c0_i32_1 : i32, i32, i32
  }
  func.func @transform_2(%arg0: i32) -> (i32, i32) {
    %c0_i32 = arith.constant 0 : i32
    %c0_i32_0 = arith.constant 0 : i32
    %c0_i32_1 = arith.constant 0 : i32
    return %c0_i32, %c0_i32_0 : i32, i32
  }
  func.func @transform_3(%arg0: i32) -> (i32, i32, i32) {
    %c0_i32 = arith.constant 0 : i32
    %c0_i32_0 = arith.constant 0 : i32
    %c0_i32_1 = arith.constant 0 : i32
    %c0_i32_2 = arith.constant 0 : i32
    return %c0_i32, %c0_i32_0, %c0_i32_1 : i32, i32, i32
  }
  func.func @transform_4(%arg0: i32) -> (i32, i32) {
    %c0_i32 = arith.constant 0 : i32
    %c0_i32_0 = arith.constant 0 : i32
    %c0_i32_1 = arith.constant 0 : i32
    return %c0_i32, %c0_i32_0 : i32, i32
  }
  func.func @transform_5(%arg0: i32) -> (i32, i32, i32) {
    %c0_i32 = arith.constant 0 : i32
    %c0_i32_0 = arith.constant 0 : i32
    %c0_i32_1 = arith.constant 0 : i32
    %c0_i32_2 = arith.constant 0 : i32
    return %c0_i32, %c0_i32_0, %c0_i32_1 : i32, i32, i32
  }
  func.func @transform_6(%arg0: i32) -> (i32, i32) {
    %c0_i32 = arith.constant 0 : i32
    %c0_i32_0 = arith.constant 0 : i32
    %c0_i32_1 = arith.constant 0 : i32
    return %c0_i32, %c0_i32_0 : i32, i32
  }
  func.func @transform_7(%arg0: i32) -> (i32, i32, i32) {
    %c0_i32 = arith.constant 0 : i32
    %c0_i32_0 = arith.constant 0 : i32
    %c0_i32_1 = arith.constant 0 : i32
    %c0_i32_2 = arith.constant 0 : i32
    return %c0_i32, %c0_i32_0, %c0_i32_1 : i32, i32, i32
  }
  func.func @transform_8(%arg0: i32) -> (i32, i32) {
    %c0_i32 = arith.constant 0 : i32
    %c0_i32_0 = arith.constant 0 : i32
    %c0_i32_1 = arith.constant 0 : i32
    return %c0_i32, %c0_i32_0 : i32, i32
  }
  func.func @transform_9(%arg0: i32) -> (i32, i32, i32) {
    %c0_i32 = arith.constant 0 : i32
    %c0_i32_0 = arith.constant 0 : i32
    %c0_i32_1 = arith.constant 0 : i32
    %c0_i32_2 = arith.constant 0 : i32
    return %c0_i32, %c0_i32_0, %c0_i32_1 : i32, i32, i32
  }
  func.func @transform_10(%arg0: i32) -> (i32, i32) {
    %c0_i32 = arith.constant 0 : i32
    %c0_i32_0 = arith.constant 0 : i32
    %c0_i32_1 = arith.constant 0 : i32
    return %c0_i32, %c0_i32_0 : i32, i32
  }
  func.func @transform_11(%arg0: i32) -> (i32, i32, i32) {
    %c0_i32 = arith.constant 0 : i32
    %c0_i32_0 = arith.constant 0 : i32
    %c0_i32_1 = arith.constant 0 : i32
    %c0_i32_2 = arith.constant 0 : i32
    return %c0_i32, %c0_i32_0, %c0_i32_1 : i32, i32, i32
  }
  func.func @transform_12(%arg0: i32) -> (i32, i32) {
    %c0_i32 = arith.constant 0 : i32
    %c0_i32_0 = arith.constant 0 : i32
    %c0_i32_1 = arith.constant 0 : i32
    return %c0_i32, %c0_i32_0 : i32, i32
  }
  func.func @transform_13(%arg0: i32) -> (i32, i32, i32) {
    %c0_i32 = arith.constant 0 : i32
    %c0_i32_0 = arith.constant 0 : i32
    %c0_i32_1 = arith.constant 0 : i32
    %c0_i32_2 = arith.constant 0 : i32
    return %c0_i32, %c0_i32_0, %c0_i32_1 : i32, i32, i32
  }
  func.func @transform_14(%arg0: i32) -> (i32, i32) {
    %c0_i32 = arith.constant 0 : i32
    %c0_i32_0 = arith.constant 0 : i32
    %c0_i32_1 = arith.constant 0 : i32
    return %c0_i32, %c0_i32_0 : i32, i32
  }
  func.func @transform_15(%arg0: i32) -> (i32, i32, i32) {
    %c0_i32 = arith.constant 0 : i32
    %c0_i32_0 = arith.constant 0 : i32
    %c0_i32_1 = arith.constant 0 : i32
    %c0_i32_2 = arith.constant 0 : i32
    return %c0_i32, %c0_i32_0, %c0_i32_1 : i32, i32, i32
  }
  func.func @transform_16(%arg0: i32) -> (i32, i32) {
    %c0_i32 = arith.constant 0 : i32
    %c0_i32_0 = arith.constant 0 : i32
    %c0_i32_1 = arith.constant 0 : i32
    return %c0_i32, %c0_i32_0 : i32, i32
  }
  func.func @transform_17(%arg0: i32) -> (i32, i32, i32) {
    %c0_i32 = arith.constant 0 : i32
    %c0_i32_0 = arith.constant 0 : i32
    %c0_i32_1 = arith.constant 0 : i32
    %c0_i32_2 = arith.constant 0 : i32
    return %c0_i32, %c0_i32_0, %c0_i32_1 : i32, i32, i32
  }
  func.func @transform_18(%arg0: i32) -> (i32, i32) {
    %c0_i32 = arith.constant 0 : i32
    %c0_i32_0 = arith.constant 0 : i32
    %c0_i32_1 = arith.constant 0 : i32
    return %c0_i32, %c0_i32_0 : i32, i32
  }
  func.func @transform_19(%arg0: i32) -> (i32, i32, i32) {
    %c0_i32 = arith.constant 0 : i32
    %c0_i32_0 = arith.constant 0 : i32
    %c0_i32_1 = arith.constant 0 : i32
    %c0_i32_2 = arith.constant 0 : i32
    return %c0_i32, %c0_i32_0, %c0_i32_1 : i32, i32, i32
  }
  func.func @transform_20(%arg0: i32) -> (i32, i32) {
    %c0_i32 = arith.constant 0 : i32
    %c0_i32_0 = arith.constant 0 : i32
    %c0_i32_1 = arith.constant 0 : i32
    return %c0_i32, %c0_i32_0 : i32, i32
  }
  func.func @transform_21(%arg0: i32) -> (i32, i32, i32) {
    %c0_i32 = arith.constant 0 : i32
    %c0_i32_0 = arith.constant 0 : i32
    %c0_i32_1 = arith.constant 0 : i32
    %c0_i32_2 = arith.constant 0 : i32
    return %c0_i32, %c0_i32_0, %c0_i32_1 : i32, i32, i32
  }
  func.func @transform_22(%arg0: i32) -> (i32, i32) {
    %c0_i32 = arith.constant 0 : i32
    %c0_i32_0 = arith.constant 0 : i32
    %c0_i32_1 = arith.constant 0 : i32
    return %c0_i32, %c0_i32_0 : i32, i32
  }
  func.func @transform_23(%arg0: i32) -> (i32, i32, i32) {
    %c0_i32 = arith.constant 0 : i32
    %c0_i32_0 = arith.constant 0 : i32
    %c0_i32_1 = arith.constant 0 : i32
    %c0_i32_2 = arith.constant 0 : i32
    return %c0_i32, %c0_i32_0, %c0_i32_1 : i32, i32, i32
  }
  func.func @transform_24(%arg0: i32) -> (i32, i32) {
    %c0_i32 = arith.constant 0 : i32
    %c0_i32_0 = arith.constant 0 : i32
    %c0_i32_1 = arith.constant 0 : i32
    return %c0_i32, %c0_i32_0 : i32, i32
  }
  func.func @transform_25(%arg0: i32) -> (i32, i32, i32) {
    %c0_i32 = arith.constant 0 : i32
    %c0_i32_0 = arith.constant 0 : i32
    %c0_i32_1 = arith.constant 0 : i32
    return %arg0, %c0_i32, %c0_i32_0 : i32, i32, i32
  }
}

</mosaic_0001>

<llo_original>
// kernel: random_window_discriminator.1
$region0: #{random_window_discriminator.1}
  #allocation0 [shape = 'u32[]', space=smem, size = 0x4, offset = 0x4, fixed_abs, tag = 'smem constant byte address 0x4 - core index']
  #allocation1 [shape = 'u32[72,128]{1,0:T(1,128)}', space=vmem, size = 0x9000, scoped, tag = 'internal scratch']
  #allocation2 [shape = 'f32[16,32]{1,0:T(8,128)}', space=vmem, size = 0x2000, scoped, tag = 'scratch operand']
  #allocation3 [shape = 'f32[1,1]{1,0:T(1,128)S(1)}', space=vmem, size = 0x200, scoped, tag = 'scoped memory for random_window_discriminator.1']
  %s0 = inlined_call_operand.vmem [shape: f32[2,16,4], index: 0, kind: input, shape index: {}]
  %s1 = inlined_call_operand.vmem [shape: f32[1,4,8], index: 1, kind: input, shape index: {}]
  %s2 = inlined_call_operand.vmem [shape: f32[1,8], index: 2, kind: input, shape index: {}]
  %s3 = inlined_call_operand.hbm [shape: f32[3,8,8], index: 3, kind: input, shape index: {}]
  %s4 = inlined_call_operand.vmem [shape: f32[1,8], index: 4, kind: input, shape index: {}]
  %s5 = inlined_call_operand.hbm [shape: f32[3,8,8], index: 5, kind: input, shape index: {}]
  %s6 = inlined_call_operand.hbm [shape: f32[1,8], index: 6, kind: input, shape index: {}]
  %s7 = inlined_call_operand.hbm [shape: f32[3,8,16], index: 7, kind: input, shape index: {}]
  %s8 = inlined_call_operand.hbm [shape: f32[1,16], index: 8, kind: input, shape index: {}]
  %s9 = inlined_call_operand.vmem [shape: f32[3,16,16], index: 9, kind: input, shape index: {}]
  %s10 = inlined_call_operand.hbm [shape: f32[1,16], index: 10, kind: input, shape index: {}]
  %s11 = inlined_call_operand.vmem [shape: f32[1,8,16], index: 11, kind: input, shape index: {}]
  %s12 = inlined_call_operand.hbm [shape: f32[1,16], index: 12, kind: input, shape index: {}]
  %s13 = inlined_call_operand.hbm [shape: f32[3,16,16], index: 13, kind: input, shape index: {}]
  %s14 = inlined_call_operand.hbm [shape: f32[1,16], index: 14, kind: input, shape index: {}]
  %s15 = inlined_call_operand.hbm [shape: f32[3,16,16], index: 15, kind: input, shape index: {}]
  %s16 = inlined_call_operand.vmem [shape: f32[1,16], index: 16, kind: input, shape index: {}]
  %s17 = inlined_call_operand.hbm [shape: f32[3,16,32], index: 17, kind: input, shape index: {}]
  %s18 = inlined_call_operand.vmem [shape: f32[1,32], index: 18, kind: input, shape index: {}]
  %s19 = inlined_call_operand.hbm [shape: f32[3,32,32], index: 19, kind: input, shape index: {}]
  %s20 = inlined_call_operand.vmem [shape: f32[1,32], index: 20, kind: input, shape index: {}]
  %s21 = inlined_call_operand.vmem [shape: f32[1,16,32], index: 21, kind: input, shape index: {}]
  %s22 = inlined_call_operand.vmem [shape: f32[1,32], index: 22, kind: input, shape index: {}]
  %s23 = inlined_call_operand.vmem [shape: f32[1,32,1], index: 23, kind: input, shape index: {}]
  %s24 = inlined_call_operand.<no memory space> [shape: f32[1,1], index: 24, kind: input, shape index: {}]
  %s25 = inlined_call_operand.vmem [shape: f32[2,4,1], index: 25, kind: output, shape index: {}]
  %s26 = sld [smem:[#allocation0]]
  $region181: #{random_window_discriminator.1} parent=0
    _
  %s28 = ssub.s32 1, %s26
  %s29 = scalar_select 0, %s28, %s26
  %v30 = vstv %s24
  %31 = vst [vmem:[#allocation3] sm:$0x1] %v30
  $region1: #{random_window_discriminator.1} parent=0
    #allocation4 [shape = 'u8[12288]{0}', space=vmem, size = 0x3000, scoped, tag = 'input window, operand 3, single buffered']
    #allocation5 [shape = 's32[2]{0}', space=sflag, size = 0x8, scoped, tag = 'scoped memory for random_window_discriminator.1']
    #allocation6 [shape = 'u8[12288]{0}', space=vmem, size = 0x3000, scoped, tag = 'input window, operand 5, single buffered']
    #allocation7 [shape = 's32[1]{0}', space=sflag, size = 0x4, scoped, tag = 'scoped memory for random_window_discriminator.1']
    #allocation8 [shape = 'u8[512]{0}', space=vmem, size = 0x400, scoped, tag = 'input window, operand 6, single buffered']
    #allocation9 [shape = 'u8[12288]{0}', space=vmem, size = 0x3000, scoped, tag = 'input window, operand 7, single buffered']
    #allocation10 [shape = 's32[1]{0}', space=sflag, size = 0x4, scoped, tag = 'scoped memory for random_window_discriminator.1']
    #allocation11 [shape = 'u8[512]{0}', space=vmem, size = 0x400, scoped, tag = 'input window, operand 8, single buffered']
    #allocation12 [shape = 'u8[512]{0}', space=vmem, size = 0x400, scoped, tag = 'input window, operand 10, single buffered']
    #allocation13 [shape = 's32[1]{0}', space=sflag, size = 0x4, scoped, tag = 'scoped memory for random_window_discriminator.1']
    #allocation14 [shape = 'u8[512]{0}', space=vmem, size = 0x400, scoped, tag = 'input window, operand 12, single buffered']
    #allocation15 [shape = 'u8[24576]{0}', space=vmem, size = 0x6000, scoped, tag = 'input window, operand 13, single buffered']
    #allocation16 [shape = 's32[1]{0}', space=sflag, size = 0x4, scoped, tag = 'scoped memory for random_window_discriminator.1']
    #allocation17 [shape = 'u8[512]{0}', space=vmem, size = 0x400, scoped, tag = 'input window, operand 14, single buffered']
    #allocation18 [shape = 'u8[24576]{0}', space=vmem, size = 0x6000, scoped, tag = 'input window, operand 15, single buffered']
    #allocation19 [shape = 's32[1]{0}', space=sflag, size = 0x4, scoped, tag = 'scoped memory for random_window_discriminator.1']
    #allocation20 [shape = 'u8[24576]{0}', space=vmem, size = 0x6000, scoped, tag = 'input window, operand 17, single buffered']
    #allocation21 [shape = 'u8[49152]{0}', space=vmem, size = 0xc000, scoped, tag = 'input window, operand 19, single buffered']
    #allocation22 [shape = 's32[1]{0}', space=sflag, size = 0x4, scoped, tag = 'scoped memory for random_window_discriminator.1']
    %32 = vsyncpa [#allocation5], 0
    %33 = vsyncpa [#allocation7], 0
    %34 = vsyncpa [#allocation10], 0
    %35 = vsyncpa [#allocation13], 0
    %36 = vsyncpa [#allocation16], 0
    %37 = vsyncpa [#allocation19], 0
    %38 = vsyncpa [#allocation22], 0
    loop: start=0, step=1, limit=4
    $region2: #{random_window_discriminator.1} parent=1 // loop_pre_header
      _
    $region3: #{random_window_discriminator.1} parent=1 // loop_header
      %s40 = sphi 0, %s44
      %p41 = scmp.ge.s32.totalorder %s40, 4
      %s50 = sphi 0, %s52
      %s53 = sphi 0, %s50
      %s54 = sphi 0, %s53
      %s70 = sphi 0, %s54
      %s74 = sphi 0, %s74
      %s76 = sphi 0, %s74
      %s77 = sphi 0, %s76
      %s91 = sphi 0, %s77
      %s95 = sphi 0, %s95
      %s97 = sphi 0, %s95
      %s98 = sphi 0, %s97
      %s112 = sphi 0, %s98
      %s116 = sphi 0, %s116
      %s118 = sphi 0, %s116
      %s119 = sphi 0, %s118
      %s133 = sphi 0, %s119
      %s137 = sphi 0, %s137
      %s139 = sphi 0, %s137
      %s140 = sphi 0, %s139
      %s154 = sphi 0, %s140
      %s158 = sphi 0, %s158
      %s160 = sphi 0, %s158
      %s161 = sphi 0, %s160
      %s175 = sphi 0, %s161
      %s179 = sphi 0, %s179
      %s181 = sphi 0, %s179
      %s182 = sphi 0, %s181
      %s196 = sphi 0, %s182
      %s200 = sphi 0, %s200
      %s202 = sphi 0, %s200
      %s203 = sphi 0, %s202
      %s217 = sphi 0, %s203
      %s221 = sphi 0, %s221
      %s223 = sphi 0, %s221
      %s224 = sphi 0, %s223
      %s238 = sphi 0, %s224
      %s242 = sphi 0, %s242
      %s244 = sphi 0, %s242
      %s245 = sphi 0, %s244
      %s259 = sphi 0, %s245
      %s263 = sphi 0, %s263
      %s265 = sphi 0, %s263
      %s266 = sphi 0, %s265
      %s280 = sphi 0, %s266
      %s284 = sphi 0, %s284
      %s286 = sphi 0, %s284
      %s287 = sphi 0, %s286
      %s301 = sphi 0, %s287
      %s305 = sphi 0, %s305
      %s307 = sphi 0, %s305
      %s308 = sphi 0, %s307
      %s322 = sphi 0, %s308
      %s326 = sphi 0, %s326
      %s328 = sphi 0, %s326
      %s329 = sphi 0, %s328
      %s343 = sphi 0, %s329
      %s347 = sphi 0, %s347
      %s349 = sphi 0, %s347
      %s350 = sphi 0, %s349
      %s364 = sphi 0, %s350
      %s368 = sphi 0, %s368
      %s370 = sphi 0, %s368
      %s371 = sphi 0, %s370
      %s385 = sphi 0, %s371
      %s389 = sphi 0, %s389
      %s391 = sphi 0, %s389
      %s392 = sphi 0, %s391
      %s406 = sphi 0, %s392
      %s410 = sphi 0, %s410
      %s412 = sphi 0, %s410
      %s413 = sphi 0, %s412
      %s427 = sphi 0, %s413
      %s431 = sphi 0, %s431
      %s433 = sphi 0, %s431
      %s434 = sphi 0, %s433
      %s448 = sphi 0, %s434
      %s452 = sphi 0, %s452
      %s454 = sphi 0, %s452
      %s455 = sphi 0, %s454
      %s469 = sphi 0, %s455
      %s473 = sphi 0, %s473
      %s475 = sphi 0, %s473
      %s476 = sphi 0, %s475
      %s490 = sphi 0, %s476
      %s494 = sphi 0, %s494
      %s496 = sphi 0, %s494
      %s497 = sphi 0, %s496
      %s511 = sphi 0, %s497
      %s515 = sphi 0, %s515
      %s517 = sphi 0, %s515
      %s518 = sphi 0, %s517
      %s532 = sphi 0, %s518
      %s536 = sphi 0, %s536
      %s538 = sphi 0, %s536
      %s539 = sphi 0, %s538
      %s553 = sphi 0, %s539
      %s557 = sphi 0, %s557
      %s559 = sphi 0, %s557
      %s560 = sphi 0, %s559
      %s574 = sphi 0, %s560
      %s580 = sphi 0, %s582
      %s583 = sphi 0, %s580
      %s584 = sphi 0, %s583
      %s600 = sphi 0, %s584
    $region4: #{random_window_discriminator.1} parent=1 // loop_header_branch
      %43 = sbr.rel (%p41) target = $region8
    $region5: #{random_window_discriminator.1} parent=1 // loop_body
      %s45 = ssub.s32 %s40, 1
      %s46 = ssub.s32 %s40, 2
      %s47 = sadd.s32 %s40, 1
      %s48 = ssub.s32 %s40, %s47
      %p49 = scmp.eq.s32.totalorder %s48, 0
      %s51 = sadd.s32 %s50, 1
      %s52 = scalar_select %p49, %s50, %s51
      %p55 = pneg %p49
      %p56 = scmp.eq.s32.totalorder %s40, 1
      %p57 = por %p55, %p56
      %p58 = scmp.ne.s32.totalorder %s50, %s53
      %p59 = scmp.eq.s32.totalorder %s40, 0
      %p60 = por %p58, %p59
      %p61 = scmp.ne.s32.totalorder %s50, %s53
      %p62 = scmp.eq.s32.totalorder %s45, 1
      %p63 = por %p61, %p62
      %p64 = scmp.ne.s32.totalorder %s53, %s54
      %p65 = scmp.eq.s32.totalorder %s45, 0
      %p66 = por %p64, %p65
      %p67 = scmp.ne.s32.totalorder %s53, %s54
      %p68 = scmp.eq.s32.totalorder %s46, 1
      %p69 = por %p67, %p68
      %p71 = scmp.ne.s32.totalorder %s54, %s70
      %p72 = scmp.eq.s32.totalorder %s46, 0
      %p73 = por %p71, %p72
      %s75 = sadd.s32 %s74, 1
      %p78 = scmp.eq.s32.totalorder %s40, 1
      %p79 = scmp.ne.s32.totalorder %s74, %s76
      %p80 = scmp.eq.s32.totalorder %s40, 0
      %p81 = por %p79, %p80
      %p82 = scmp.ne.s32.totalorder %s74, %s76
      %p83 = scmp.eq.s32.totalorder %s45, 1
      %p84 = por %p82, %p83
      %p85 = scmp.ne.s32.totalorder %s76, %s77
      %p86 = scmp.eq.s32.totalorder %s45, 0
      %p87 = por %p85, %p86
      %p88 = scmp.ne.s32.totalorder %s76, %s77
      %p89 = scmp.eq.s32.totalorder %s46, 1
      %p90 = por %p88, %p89
      %p92 = scmp.ne.s32.totalorder %s77, %s91
      %p93 = scmp.eq.s32.totalorder %s46, 0
      %p94 = por %p92, %p93
      %s96 = sadd.s32 %s95, 1
      %p99 = scmp.eq.s32.totalorder %s40, 1
      %p100 = scmp.ne.s32.totalorder %s95, %s97
      %p101 = scmp.eq.s32.totalorder %s40, 0
      %p102 = por %p100, %p101
      %p103 = scmp.ne.s32.totalorder %s95, %s97
      %p104 = scmp.eq.s32.totalorder %s45, 1
      %p105 = por %p103, %p104
      %p106 = scmp.ne.s32.totalorder %s97, %s98
      %p107 = scmp.eq.s32.totalorder %s45, 0
      %p108 = por %p106, %p107
      %p109 = scmp.ne.s32.totalorder %s97, %s98
      %p110 = scmp.eq.s32.totalorder %s46, 1
      %p111 = por %p109, %p110
      %p113 = scmp.ne.s32.totalorder %s98, %s112
      %p114 = scmp.eq.s32.totalorder %s46, 0
      %p115 = por %p113, %p114
      %s117 = sadd.s32 %s116, 1
      %p120 = scmp.eq.s32.totalorder %s40, 1
      %p121 = scmp.ne.s32.totalorder %s116, %s118
      %p122 = scmp.eq.s32.totalorder %s40, 0
      %p123 = por %p121, %p122
      %p124 = scmp.ne.s32.totalorder %s116, %s118
      %p125 = scmp.eq.s32.totalorder %s45, 1
      %p126 = por %p124, %p125
      %p127 = scmp.ne.s32.totalorder %s118, %s119
      %p128 = scmp.eq.s32.totalorder %s45, 0
      %p129 = por %p127, %p128
      %p130 = scmp.ne.s32.totalorder %s118, %s119
      %p131 = scmp.eq.s32.totalorder %s46, 1
      %p132 = por %p130, %p131
      %p134 = scmp.ne.s32.totalorder %s119, %s133
      %p135 = scmp.eq.s32.totalorder %s46, 0
      %p136 = por %p134, %p135
      %s138 = sadd.s32 %s137, 1
      %p141 = scmp.eq.s32.totalorder %s40, 1
      %p142 = scmp.ne.s32.totalorder %s137, %s139
      %p143 = scmp.eq.s32.totalorder %s40, 0
      %p144 = por %p142, %p143
      %p145 = scmp.ne.s32.totalorder %s137, %s139
      %p146 = scmp.eq.s32.totalorder %s45, 1
      %p147 = por %p145, %p146
      %p148 = scmp.ne.s32.totalorder %s139, %s140
      %p149 = scmp.eq.s32.totalorder %s45, 0
      %p150 = por %p148, %p149
      %p151 = scmp.ne.s32.totalorder %s139, %s140
      %p152 = scmp.eq.s32.totalorder %s46, 1
      %p153 = por %p151, %p152
      %p155 = scmp.ne.s32.totalorder %s140, %s154
      %p156 = scmp.eq.s32.totalorder %s46, 0
      %p157 = por %p155, %p156
      %s159 = sadd.s32 %s158, 1
      %p162 = scmp.eq.s32.totalorder %s40, 1
      %p163 = scmp.ne.s32.totalorder %s158, %s160
      %p164 = scmp.eq.s32.totalorder %s40, 0
      %p165 = por %p163, %p164
      %p166 = scmp.ne.s32.totalorder %s158, %s160
      %p167 = scmp.eq.s32.totalorder %s45, 1
      %p168 = por %p166, %p167
      %p169 = scmp.ne.s32.totalorder %s160, %s161
      %p170 = scmp.eq.s32.totalorder %s45, 0
      %p171 = por %p169, %p170
      %p172 = scmp.ne.s32.totalorder %s160, %s161
      %p173 = scmp.eq.s32.totalorder %s46, 1
      %p174 = por %p172, %p173
      %p176 = scmp.ne.s32.totalorder %s161, %s175
      %p177 = scmp.eq.s32.totalorder %s46, 0
      %p178 = por %p176, %p177
      %s180 = sadd.s32 %s179, 1
      %p183 = scmp.eq.s32.totalorder %s40, 1
      %p184 = scmp.ne.s32.totalorder %s179, %s181
      %p185 = scmp.eq.s32.totalorder %s40, 0
      %p186 = por %p184, %p185
      %p187 = scmp.ne.s32.totalorder %s179, %s181
      %p188 = scmp.eq.s32.totalorder %s45, 1
      %p189 = por %p187, %p188
      %p190 = scmp.ne.s32.totalorder %s181, %s182
      %p191 = scmp.eq.s32.totalorder %s45, 0
      %p192 = por %p190, %p191
      %p193 = scmp.ne.s32.totalorder %s181, %s182
      %p194 = scmp.eq.s32.totalorder %s46, 1
      %p195 = por %p193, %p194
      %p197 = scmp.ne.s32.totalorder %s182, %s196
      %p198 = scmp.eq.s32.totalorder %s46, 0
      %p199 = por %p197, %p198
      %s201 = sadd.s32 %s200, 1
      %p204 = scmp.eq.s32.totalorder %s40, 1
      %p205 = scmp.ne.s32.totalorder %s200, %s202
      %p206 = scmp.eq.s32.totalorder %s40, 0
      %p207 = por %p205, %p206
      %p208 = scmp.ne.s32.totalorder %s200, %s202
      %p209 = scmp.eq.s32.totalorder %s45, 1
      %p210 = por %p208, %p209
      %p211 = scmp.ne.s32.totalorder %s202, %s203
      %p212 = scmp.eq.s32.totalorder %s45, 0
      %p213 = por %p211, %p212
      %p214 = scmp.ne.s32.totalorder %s202, %s203
      %p215 = scmp.eq.s32.totalorder %s46, 1
      %p216 = por %p214, %p215
      %p218 = scmp.ne.s32.totalorder %s203, %s217
      %p219 = scmp.eq.s32.totalorder %s46, 0
      %p220 = por %p218, %p219
      %s222 = sadd.s32 %s221, 1
      %p225 = scmp.eq.s32.totalorder %s40, 1
      %p226 = scmp.ne.s32.totalorder %s221, %s223
      %p227 = scmp.eq.s32.totalorder %s40, 0
      %p228 = por %p226, %p227
      %p229 = scmp.ne.s32.totalorder %s221, %s223
      %p230 = scmp.eq.s32.totalorder %s45, 1
      %p231 = por %p229, %p230
      %p232 = scmp.ne.s32.totalorder %s223, %s224
      %p233 = scmp.eq.s32.totalorder %s45, 0
      %p234 = por %p232, %p233
      %p235 = scmp.ne.s32.totalorder %s223, %s224
      %p236 = scmp.eq.s32.totalorder %s46, 1
      %p237 = por %p235, %p236
      %p239 = scmp.ne.s32.totalorder %s224, %s238
      %p240 = scmp.eq.s32.totalorder %s46, 0
      %p241 = por %p239, %p240
      %s243 = sadd.s32 %s242, 1
      %p246 = scmp.eq.s32.totalorder %s40, 1
      %p247 = scmp.ne.s32.totalorder %s242, %s244
      %p248 = scmp.eq.s32.totalorder %s40, 0
      %p249 = por %p247, %p248
      %p250 = scmp.ne.s32.totalorder %s242, %s244
      %p251 = scmp.eq.s32.totalorder %s45, 1
      %p252 = por %p250, %p251
      %p253 = scmp.ne.s32.totalorder %s244, %s245
      %p254 = scmp.eq.s32.totalorder %s45, 0
      %p255 = por %p253, %p254
      %p256 = scmp.ne.s32.totalorder %s244, %s245
      %p257 = scmp.eq.s32.totalorder %s46, 1
      %p258 = por %p256, %p257
      %p260 = scmp.ne.s32.totalorder %s245, %s259
      %p261 = scmp.eq.s32.totalorder %s46, 0
      %p262 = por %p260, %p261
      %s264 = sadd.s32 %s263, 1
      %p267 = scmp.eq.s32.totalorder %s40, 1
      %p268 = scmp.ne.s32.totalorder %s263, %s265
      %p269 = scmp.eq.s32.totalorder %s40, 0
      %p270 = por %p268, %p269
      %p271 = scmp.ne.s32.totalorder %s263, %s265
      %p272 = scmp.eq.s32.totalorder %s45, 1
      %p273 = por %p271, %p272
      %p274 = scmp.ne.s32.totalorder %s265, %s266
      %p275 = scmp.eq.s32.totalorder %s45, 0
      %p276 = por %p274, %p275
      %p277 = scmp.ne.s32.totalorder %s265, %s266
      %p278 = scmp.eq.s32.totalorder %s46, 1
      %p279 = por %p277, %p278
      %p281 = scmp.ne.s32.totalorder %s266, %s280
      %p282 = scmp.eq.s32.totalorder %s46, 0
      %p283 = por %p281, %p282
      %s285 = sadd.s32 %s284, 1
      %p288 = scmp.eq.s32.totalorder %s40, 1
      %p289 = scmp.ne.s32.totalorder %s284, %s286
      %p290 = scmp.eq.s32.totalorder %s40, 0
      %p291 = por %p289, %p290
      %p292 = scmp.ne.s32.totalorder %s284, %s286
      %p293 = scmp.eq.s32.totalorder %s45, 1
      %p294 = por %p292, %p293
      %p295 = scmp.ne.s32.totalorder %s286, %s287
      %p296 = scmp.eq.s32.totalorder %s45, 0
      %p297 = por %p295, %p296
      %p298 = scmp.ne.s32.totalorder %s286, %s287
      %p299 = scmp.eq.s32.totalorder %s46, 1
      %p300 = por %p298, %p299
      %p302 = scmp.ne.s32.totalorder %s287, %s301
      %p303 = scmp.eq.s32.totalorder %s46, 0
      %p304 = por %p302, %p303
      %s306 = sadd.s32 %s305, 1
      %p309 = scmp.eq.s32.totalorder %s40, 1
      %p310 = scmp.ne.s32.totalorder %s305, %s307
      %p311 = scmp.eq.s32.totalorder %s40, 0
      %p312 = por %p310, %p311
      %p313 = scmp.ne.s32.totalorder %s305, %s307
      %p314 = scmp.eq.s32.totalorder %s45, 1
      %p315 = por %p313, %p314
      %p316 = scmp.ne.s32.totalorder %s307, %s308
      %p317 = scmp.eq.s32.totalorder %s45, 0
      %p318 = por %p316, %p317
      %p319 = scmp.ne.s32.totalorder %s307, %s308
      %p320 = scmp.eq.s32.totalorder %s46, 1
      %p321 = por %p319, %p320
      %p323 = scmp.ne.s32.totalorder %s308, %s322
      %p324 = scmp.eq.s32.totalorder %s46, 0
      %p325 = por %p323, %p324
      %s327 = sadd.s32 %s326, 1
      %p330 = scmp.eq.s32.totalorder %s40, 1
      %p331 = scmp.ne.s32.totalorder %s326, %s328
      %p332 = scmp.eq.s32.totalorder %s40, 0
      %p333 = por %p331, %p332
      %p334 = scmp.ne.s32.totalorder %s326, %s328
      %p335 = scmp.eq.s32.totalorder %s45, 1
      %p336 = por %p334, %p335
      %p337 = scmp.ne.s32.totalorder %s328, %s329
      %p338 = scmp.eq.s32.totalorder %s45, 0
      %p339 = por %p337, %p338
      %p340 = scmp.ne.s32.totalorder %s328, %s329
      %p341 = scmp.eq.s32.totalorder %s46, 1
      %p342 = por %p340, %p341
      %p344 = scmp.ne.s32.totalorder %s329, %s343
      %p345 = scmp.eq.s32.totalorder %s46, 0
      %p346 = por %p344, %p345
      %s348 = sadd.s32 %s347, 1
      %p351 = scmp.eq.s32.totalorder %s40, 1
      %p352 = scmp.ne.s32.totalorder %s347, %s349
      %p353 = scmp.eq.s32.totalorder %s40, 0
      %p354 = por %p352, %p353
      %p355 = scmp.ne.s32.totalorder %s347, %s349
      %p356 = scmp.eq.s32.totalorder %s45, 1
      %p357 = por %p355, %p356
      %p358 = scmp.ne.s32.totalorder %s349, %s350
      %p359 = scmp.eq.s32.totalorder %s45, 0
      %p360 = por %p358, %p359
      %p361 = scmp.ne.s32.totalorder %s349, %s350
      %p362 = scmp.eq.s32.totalorder %s46, 1
      %p363 = por %p361, %p362
      %p365 = scmp.ne.s32.totalorder %s350, %s364
      %p366 = scmp.eq.s32.totalorder %s46, 0
      %p367 = por %p365, %p366
      %s369 = sadd.s32 %s368, 1
      %p372 = scmp.eq.s32.totalorder %s40, 1
      %p373 = scmp.ne.s32.totalorder %s368, %s370
      %p374 = scmp.eq.s32.totalorder %s40, 0
      %p375 = por %p373, %p374
      %p376 = scmp.ne.s32.totalorder %s368, %s370
      %p377 = scmp.eq.s32.totalorder %s45, 1
      %p378 = por %p376, %p377
      %p379 = scmp.ne.s32.totalorder %s370, %s371
      %p380 = scmp.eq.s32.totalorder %s45, 0
      %p381 = por %p379, %p380
      %p382 = scmp.ne.s32.totalorder %s370, %s371
      %p383 = scmp.eq.s32.totalorder %s46, 1
      %p384 = por %p382, %p383
      %p386 = scmp.ne.s32.totalorder %s371, %s385
      %p387 = scmp.eq.s32.totalorder %s46, 0
      %p388 = por %p386, %p387
      %s390 = sadd.s32 %s389, 1
      %p393 = scmp.eq.s32.totalorder %s40, 1
      %p394 = scmp.ne.s32.totalorder %s389, %s391
      %p395 = scmp.eq.s32.totalorder %s40, 0
      %p396 = por %p394, %p395
      %p397 = scmp.ne.s32.totalorder %s389, %s391
      %p398 = scmp.eq.s32.totalorder %s45, 1
      %p399 = por %p397, %p398
      %p400 = scmp.ne.s32.totalorder %s391, %s392
      %p401 = scmp.eq.s32.totalorder %s45, 0
      %p402 = por %p400, %p401
      %p403 = scmp.ne.s32.totalorder %s391, %s392
      %p404 = scmp.eq.s32.totalorder %s46, 1
      %p405 = por %p403, %p404
      %p407 = scmp.ne.s32.totalorder %s392, %s406
      %p408 = scmp.eq.s32.totalorder %s46, 0
      %p409 = por %p407, %p408
      %s411 = sadd.s32 %s410, 1
      %p414 = scmp.eq.s32.totalorder %s40, 1
      %p415 = scmp.ne.s32.totalorder %s410, %s412
      %p416 = scmp.eq.s32.totalorder %s40, 0
      %p417 = por %p415, %p416
      %p418 = scmp.ne.s32.totalorder %s410, %s412
      %p419 = scmp.eq.s32.totalorder %s45, 1
      %p420 = por %p418, %p419
      %p421 = scmp.ne.s32.totalorder %s412, %s413
      %p422 = scmp.eq.s32.totalorder %s45, 0
      %p423 = por %p421, %p422
      %p424 = scmp.ne.s32.totalorder %s412, %s413
      %p425 = scmp.eq.s32.totalorder %s46, 1
      %p426 = por %p424, %p425
      %p428 = scmp.ne.s32.totalorder %s413, %s427
      %p429 = scmp.eq.s32.totalorder %s46, 0
      %p430 = por %p428, %p429
      %s432 = sadd.s32 %s431, 1
      %p435 = scmp.eq.s32.totalorder %s40, 1
      %p436 = scmp.ne.s32.totalorder %s431, %s433
      %p437 = scmp.eq.s32.totalorder %s40, 0
      %p438 = por %p436, %p437
      %p439 = scmp.ne.s32.totalorder %s431, %s433
      %p440 = scmp.eq.s32.totalorder %s45, 1
      %p441 = por %p439, %p440
      %p442 = scmp.ne.s32.totalorder %s433, %s434
      %p443 = scmp.eq.s32.totalorder %s45, 0
      %p444 = por %p442, %p443
      %p445 = scmp.ne.s32.totalorder %s433, %s434
      %p446 = scmp.eq.s32.totalorder %s46, 1
      %p447 = por %p445, %p446
      %p449 = scmp.ne.s32.totalorder %s434, %s448
      %p450 = scmp.eq.s32.totalorder %s46, 0
      %p451 = por %p449, %p450
      %s453 = sadd.s32 %s452, 1
      %p456 = scmp.eq.s32.totalorder %s40, 1
      %p457 = scmp.ne.s32.totalorder %s452, %s454
      %p458 = scmp.eq.s32.totalorder %s40, 0
      %p459 = por %p457, %p458
      %p460 = scmp.ne.s32.totalorder %s452, %s454
      %p461 = scmp.eq.s32.totalorder %s45, 1
      %p462 = por %p460, %p461
      %p463 = scmp.ne.s32.totalorder %s454, %s455
      %p464 = scmp.eq.s32.totalorder %s45, 0
      %p465 = por %p463, %p464
      %p466 = scmp.ne.s32.totalorder %s454, %s455
      %p467 = scmp.eq.s32.totalorder %s46, 1
      %p468 = por %p466, %p467
      %p470 = scmp.ne.s32.totalorder %s455, %s469
      %p471 = scmp.eq.s32.totalorder %s46, 0
      %p472 = por %p470, %p471
      %s474 = sadd.s32 %s473, 1
      %p477 = scmp.eq.s32.totalorder %s40, 1
      %p478 = scmp.ne.s32.totalorder %s473, %s475
      %p479 = scmp.eq.s32.totalorder %s40, 0
      %p480 = por %p478, %p479
      %p481 = scmp.ne.s32.totalorder %s473, %s475
      %p482 = scmp.eq.s32.totalorder %s45, 1
      %p483 = por %p481, %p482
      %p484 = scmp.ne.s32.totalorder %s475, %s476
      %p485 = scmp.eq.s32.totalorder %s45, 0
      %p486 = por %p484, %p485
      %p487 = scmp.ne.s32.totalorder %s475, %s476
      %p488 = scmp.eq.s32.totalorder %s46, 1
      %p489 = por %p487, %p488
      %p491 = scmp.ne.s32.totalorder %s476, %s490
      %p492 = scmp.eq.s32.totalorder %s46, 0
      %p493 = por %p491, %p492
      %s495 = sadd.s32 %s494, 1
      %p498 = scmp.eq.s32.totalorder %s40, 1
      %p499 = scmp.ne.s32.totalorder %s494, %s496
      %p500 = scmp.eq.s32.totalorder %s40, 0
      %p501 = por %p499, %p500
      %p502 = scmp.ne.s32.totalorder %s494, %s496
      %p503 = scmp.eq.s32.totalorder %s45, 1
      %p504 = por %p502, %p503
      %p505 = scmp.ne.s32.totalorder %s496, %s497
      %p506 = scmp.eq.s32.totalorder %s45, 0
      %p507 = por %p505, %p506
      %p508 = scmp.ne.s32.totalorder %s496, %s497
      %p509 = scmp.eq.s32.totalorder %s46, 1
      %p510 = por %p508, %p509
      %p512 = scmp.ne.s32.totalorder %s497, %s511
      %p513 = scmp.eq.s32.totalorder %s46, 0
      %p514 = por %p512, %p513
      %s516 = sadd.s32 %s515, 1
      %p519 = scmp.eq.s32.totalorder %s40, 1
      %p520 = scmp.ne.s32.totalorder %s515, %s517
      %p521 = scmp.eq.s32.totalorder %s40, 0
      %p522 = por %p520, %p521
      %p523 = scmp.ne.s32.totalorder %s515, %s517
      %p524 = scmp.eq.s32.totalorder %s45, 1
      %p525 = por %p523, %p524
      %p526 = scmp.ne.s32.totalorder %s517, %s518
      %p527 = scmp.eq.s32.totalorder %s45, 0
      %p528 = por %p526, %p527
      %p529 = scmp.ne.s32.totalorder %s517, %s518
      %p530 = scmp.eq.s32.totalorder %s46, 1
      %p531 = por %p529, %p530
      %p533 = scmp.ne.s32.totalorder %s518, %s532
      %p534 = scmp.eq.s32.totalorder %s46, 0
      %p535 = por %p533, %p534
      %s537 = sadd.s32 %s536, 1
      %p540 = scmp.eq.s32.totalorder %s40, 1
      %p541 = scmp.ne.s32.totalorder %s536, %s538
      %p542 = scmp.eq.s32.totalorder %s40, 0
      %p543 = por %p541, %p542
      %p544 = scmp.ne.s32.totalorder %s536, %s538
      %p545 = scmp.eq.s32.totalorder %s45, 1
      %p546 = por %p544, %p545
      %p547 = scmp.ne.s32.totalorder %s538, %s539
      %p548 = scmp.eq.s32.totalorder %s45, 0
      %p549 = por %p547, %p548
      %p550 = scmp.ne.s32.totalorder %s538, %s539
      %p551 = scmp.eq.s32.totalorder %s46, 1
      %p552 = por %p550, %p551
      %p554 = scmp.ne.s32.totalorder %s539, %s553
      %p555 = scmp.eq.s32.totalorder %s46, 0
      %p556 = por %p554, %p555
      %s558 = sadd.s32 %s557, 1
      %p561 = scmp.eq.s32.totalorder %s40, 1
      %p562 = scmp.ne.s32.totalorder %s557, %s559
      %p563 = scmp.eq.s32.totalorder %s40, 0
      %p564 = por %p562, %p563
      %p565 = scmp.ne.s32.totalorder %s557, %s559
      %p566 = scmp.eq.s32.totalorder %s45, 1
      %p567 = por %p565, %p566
      %p568 = scmp.ne.s32.totalorder %s559, %s560
      %p569 = scmp.eq.s32.totalorder %s45, 0
      %p570 = por %p568, %p569
      %p571 = scmp.ne.s32.totalorder %s559, %s560
      %p572 = scmp.eq.s32.totalorder %s46, 1
      %p573 = por %p571, %p572
      %p575 = scmp.ne.s32.totalorder %s560, %s574
      %p576 = scmp.eq.s32.totalorder %s46, 0
      %p577 = por %p575, %p576
      %s578 = ssub.s32 %s40, %s47
      %p579 = scmp.eq.s32.totalorder %s578, 0
      %s581 = sadd.s32 %s580, 1
      %s582 = scalar_select %p579, %s580, %s581
      %p585 = pneg %p579
      %p586 = scmp.eq.s32.totalorder %s40, 1
      %p587 = por %p585, %p586
      %p588 = scmp.ne.s32.totalorder %s580, %s583
      %p589 = scmp.eq.s32.totalorder %s40, 0
      %p590 = por %p588, %p589
      %p591 = scmp.ne.s32.totalorder %s580, %s583
      %p592 = scmp.eq.s32.totalorder %s45, 1
      %p593 = por %p591, %p592
      %p594 = scmp.ne.s32.totalorder %s583, %s584
      %p595 = scmp.eq.s32.totalorder %s45, 0
      %p596 = por %p594, %p595
      %p597 = scmp.ne.s32.totalorder %s583, %s584
      %p598 = scmp.eq.s32.totalorder %s46, 1
      %p599 = por %p597, %p598
      %p601 = scmp.ne.s32.totalorder %s584, %s600
      %p602 = scmp.eq.s32.totalorder %s46, 0
      %p603 = por %p601, %p602
      %p604 = scmp.le.s32.totalorder 1, %s40
      %p605 = scmp.lt.s32.totalorder %s40, 3
      %p606 = pnand %p604, %p605
      %p607 = pneg %p606
      // Predicated region
      $region9: #{random_window_discriminator.1} parent=5 // pred_check
        _
      $region10: #{random_window_discriminator.1} parent=5 // pred_check_branch
        %609 = sbr.rel (%p606) target = $region12
      $region11: #{random_window_discriminator.1} parent=5 // pred_region
        %s610 = ssub.s32 %s40, 1
        // Predicated region
        $region13: #{random_window_discriminator.1} parent=11 // pred_check
          %p611 = pneg %p87
        $region14: #{random_window_discriminator.1} parent=11 // pred_check_branch
          %613 = sbr.rel (%p611) target = $region16
        $region15: #{random_window_discriminator.1} parent=11 // pred_region
          _
        $region16: #{random_window_discriminator.1} parent=11 // pred_fallthru
          _
        // Predicated region
        $region17: #{random_window_discriminator.1} parent=11 // pred_check
          %p614 = pneg %p108
        $region18: #{random_window_discriminator.1} parent=11 // pred_check_branch
          %616 = sbr.rel (%p614) target = $region20
        $region19: #{random_window_discriminator.1} parent=11 // pred_region
          _
        $region20: #{random_window_discriminator.1} parent=11 // pred_fallthru
          _
        // Predicated region
        $region21: #{random_window_discriminator.1} parent=11 // pred_check
          %p617 = pneg %p129
        $region22: #{random_window_discriminator.1} parent=11 // pred_check_branch
          %619 = sbr.rel (%p617) target = $region24
        $region23: #{random_window_discriminator.1} parent=11 // pred_region
          %621 = vsyncadd [#allocation5], 0
          %s622 = sshll.u32 %s3, 4
          %s623 = int_to_ptr.hbm [resolvable:$true] %s622
          %s624 = sshll.u32 [#allocation4], 4
          %s625 = int_to_ptr.vmem [resolvable:$true] %s624
          %630 = dma.hbm_to_vmem [thread:$0]  %s623, 384, %s625, [#allocation5], 128, 128, 8
        $region24: #{random_window_discriminator.1} parent=11 // pred_fallthru
          _
        // Predicated region
        $region25: #{random_window_discriminator.1} parent=11 // pred_check
          %p631 = pneg %p150
        $region26: #{random_window_discriminator.1} parent=11 // pred_check_branch
          %633 = sbr.rel (%p631) target = $region28
        $region27: #{random_window_discriminator.1} parent=11 // pred_region
          _
        $region28: #{random_window_discriminator.1} parent=11 // pred_fallthru
          _
        // Predicated region
        $region29: #{random_window_discriminator.1} parent=11 // pred_check
          %p634 = pneg %p171
        $region30: #{random_window_discriminator.1} parent=11 // pred_check_branch
          %636 = sbr.rel (%p634) target = $region32
        $region31: #{random_window_discriminator.1} parent=11 // pred_region
          %638 = vsyncadd [#allocation7], 0
          %s639 = sshll.u32 %s5, 4
          %s640 = int_to_ptr.hbm [resolvable:$true] %s639
          %s641 = sshll.u32 [#allocation6], 4
          %s642 = int_to_ptr.vmem [resolvable:$true] %s641
          %647 = dma.hbm_to_vmem [thread:$0]  %s640, 384, %s642, [#allocation7], 128, 128, 8
        $region32: #{random_window_discriminator.1} parent=11 // pred_fallthru
          _
        // Predicated region
        $region33: #{random_window_discriminator.1} parent=11 // pred_check
          %p648 = pneg %p192
        $region34: #{random_window_discriminator.1} parent=11 // pred_check_branch
          %650 = sbr.rel (%p648) target = $region36
        $region35: #{random_window_discriminator.1} parent=11 // pred_region
          %652 = vsyncadd [#allocation7], 0
          %s654 = sshll.u32 %s6, 4
          %s655 = int_to_ptr.hbm [resolvable:$true] %s654
          %s656 = sshll.u32 [#allocation8], 4
          %s657 = int_to_ptr.vmem [resolvable:$true] %s656
          %659 = dma.hbm_to_vmem [thread:$0]  %s655, 16, %s657, [#allocation7]
        $region36: #{random_window_discriminator.1} parent=11 // pred_fallthru
          _
        // Predicated region
        $region37: #{random_window_discriminator.1} parent=11 // pred_check
          %p660 = pneg %p213
        $region38: #{random_window_discriminator.1} parent=11 // pred_check_branch
          %662 = sbr.rel (%p660) target = $region40
        $region39: #{random_window_discriminator.1} parent=11 // pred_region
          %664 = vsyncadd [#allocation10], 0
          %s665 = sshll.u32 %s7, 4
          %s666 = int_to_ptr.hbm [resolvable:$true] %s665
          %s667 = sshll.u32 [#allocation9], 4
          %s668 = int_to_ptr.vmem [resolvable:$true] %s667
          %673 = dma.hbm_to_vmem [thread:$0]  %s666, 384, %s668, [#allocation10], 128, 128, 8
        $region40: #{random_window_discriminator.1} parent=11 // pred_fallthru
          _
        // Predicated region
        $region41: #{random_window_discriminator.1} parent=11 // pred_check
          %p674 = pneg %p234
        $region42: #{random_window_discriminator.1} parent=11 // pred_check_branch
          %676 = sbr.rel (%p674) target = $region44
        $region43: #{random_window_discriminator.1} parent=11 // pred_region
          %678 = vsyncadd [#allocation10], 0
          %s680 = sshll.u32 %s8, 4
          %s681 = int_to_ptr.hbm [resolvable:$true] %s680
          %s682 = sshll.u32 [#allocation11], 4
          %s683 = int_to_ptr.vmem [resolvable:$true] %s682
          %685 = dma.hbm_to_vmem [thread:$0]  %s681, 16, %s683, [#allocation10]
        $region44: #{random_window_discriminator.1} parent=11 // pred_fallthru
          _
        // Predicated region
        $region45: #{random_window_discriminator.1} parent=11 // pred_check
          %p686 = pneg %p255
        $region46: #{random_window_discriminator.1} parent=11 // pred_check_branch
          %688 = sbr.rel (%p686) target = $region48
        $region47: #{random_window_discriminator.1} parent=11 // pred_region
          _
        $region48: #{random_window_discriminator.1} parent=11 // pred_fallthru
          _
        // Predicated region
        $region49: #{random_window_discriminator.1} parent=11 // pred_check
          %p689 = pneg %p276
        $region50: #{random_window_discriminator.1} parent=11 // pred_check_branch
          %691 = sbr.rel (%p689) target = $region52
        $region51: #{random_window_discriminator.1} parent=11 // pred_region
          %693 = vsyncadd [#allocation13], 0
          %s695 = sshll.u32 %s10, 4
          %s696 = int_to_ptr.hbm [resolvable:$true] %s695
          %s697 = sshll.u32 [#allocation12], 4
          %s698 = int_to_ptr.vmem [resolvable:$true] %s697
          %700 = dma.hbm_to_vmem [thread:$0]  %s696, 16, %s698, [#allocation13]
        $region52: #{random_window_discriminator.1} parent=11 // pred_fallthru
          _
        // Predicated region
        $region53: #{random_window_discriminator.1} parent=11 // pred_check
          %p701 = pneg %p297
        $region54: #{random_window_discriminator.1} parent=11 // pred_check_branch
          %703 = sbr.rel (%p701) target = $region56
        $region55: #{random_window_discriminator.1} parent=11 // pred_region
          _
        $region56: #{random_window_discriminator.1} parent=11 // pred_fallthru
          _
        // Predicated region
        $region57: #{random_window_discriminator.1} parent=11 // pred_check
          %p704 = pneg %p318
        $region58: #{random_window_discriminator.1} parent=11 // pred_check_branch
          %706 = sbr.rel (%p704) target = $region60
        $region59: #{random_window_discriminator.1} parent=11 // pred_region
          %708 = vsyncadd [#allocation13], 0
          %s710 = sshll.u32 %s12, 4
          %s711 = int_to_ptr.hbm [resolvable:$true] %s710
          %s712 = sshll.u32 [#allocation14], 4
          %s713 = int_to_ptr.vmem [resolvable:$true] %s712
          %715 = dma.hbm_to_vmem [thread:$0]  %s711, 16, %s713, [#allocation13]
        $region60: #{random_window_discriminator.1} parent=11 // pred_fallthru
          _
        // Predicated region
        $region61: #{random_window_discriminator.1} parent=11 // pred_check
          %p716 = pneg %p339
        $region62: #{random_window_discriminator.1} parent=11 // pred_check_branch
          %718 = sbr.rel (%p716) target = $region64
        $region63: #{random_window_discriminator.1} parent=11 // pred_region
          %720 = vsyncadd [#allocation16], 0
          %s721 = sshll.u32 %s13, 4
          %s722 = int_to_ptr.hbm [resolvable:$true] %s721
          %s723 = sshll.u32 [#allocation15], 4
          %s724 = int_to_ptr.vmem [resolvable:$true] %s723
          %729 = dma.hbm_to_vmem [thread:$0]  %s722, 768, %s724, [#allocation16], 128, 128, 8
        $region64: #{random_window_discriminator.1} parent=11 // pred_fallthru
          _
        // Predicated region
        $region65: #{random_window_discriminator.1} parent=11 // pred_check
          %p730 = pneg %p360
        $region66: #{random_window_discriminator.1} parent=11 // pred_check_branch
          %732 = sbr.rel (%p730) target = $region68
        $region67: #{random_window_discriminator.1} parent=11 // pred_region
          %734 = vsyncadd [#allocation16], 0
          %s736 = sshll.u32 %s14, 4
          %s737 = int_to_ptr.hbm [resolvable:$true] %s736
          %s738 = sshll.u32 [#allocation17], 4
          %s739 = int_to_ptr.vmem [resolvable:$true] %s738
          %741 = dma.hbm_to_vmem [thread:$0]  %s737, 16, %s739, [#allocation16]
        $region68: #{random_window_discriminator.1} parent=11 // pred_fallthru
          _
        // Predicated region
        $region69: #{random_window_discriminator.1} parent=11 // pred_check
          %p742 = pneg %p381
        $region70: #{random_window_discriminator.1} parent=11 // pred_check_branch
          %744 = sbr.rel (%p742) target = $region72
        $region71: #{random_window_discriminator.1} parent=11 // pred_region
          %746 = vsyncadd [#allocation19], 0
          %s747 = sshll.u32 %s15, 4
          %s748 = int_to_ptr.hbm [resolvable:$true] %s747
          %s749 = sshll.u32 [#allocation18], 4
          %s750 = int_to_ptr.vmem [resolvable:$true] %s749
          %755 = dma.hbm_to_vmem [thread:$0]  %s748, 768, %s750, [#allocation19], 128, 128, 8
        $region72: #{random_window_discriminator.1} parent=11 // pred_fallthru
          _
        // Predicated region
        $region73: #{random_window_discriminator.1} parent=11 // pred_check
          %p756 = pneg %p402
        $region74: #{random_window_discriminator.1} parent=11 // pred_check_branch
          %758 = sbr.rel (%p756) target = $region76
        $region75: #{random_window_discriminator.1} parent=11 // pred_region
          _
        $region76: #{random_window_discriminator.1} parent=11 // pred_fallthru
          _
        // Predicated region
        $region77: #{random_window_discriminator.1} parent=11 // pred_check
          %p759 = pneg %p423
        $region78: #{random_window_discriminator.1} parent=11 // pred_check_branch
          %761 = sbr.rel (%p759) target = $region80
        $region79: #{random_window_discriminator.1} parent=11 // pred_region
          %763 = vsyncadd [#allocation19], 0
          %s764 = sshll.u32 %s17, 4
          %s765 = int_to_ptr.hbm [resolvable:$true] %s764
          %s766 = sshll.u32 [#allocation20], 4
          %s767 = int_to_ptr.vmem [resolvable:$true] %s766
          %772 = dma.hbm_to_vmem [thread:$0]  %s765, 768, %s767, [#allocation19], 128, 128, 8
        $region80: #{random_window_discriminator.1} parent=11 // pred_fallthru
          _
        // Predicated region
        $region81: #{random_window_discriminator.1} parent=11 // pred_check
          %p773 = pneg %p444
        $region82: #{random_window_discriminator.1} parent=11 // pred_check_branch
          %775 = sbr.rel (%p773) target = $region84
        $region83: #{random_window_discriminator.1} parent=11 // pred_region
          _
        $region84: #{random_window_discriminator.1} parent=11 // pred_fallthru
          _
        // Predicated region
        $region85: #{random_window_discriminator.1} parent=11 // pred_check
          %p776 = pneg %p465
        $region86: #{random_window_discriminator.1} parent=11 // pred_check_branch
          %778 = sbr.rel (%p776) target = $region88
        $region87: #{random_window_discriminator.1} parent=11 // pred_region
          %780 = vsyncadd [#allocation22], 0
          %s781 = sshll.u32 %s19, 4
          %s782 = int_to_ptr.hbm [resolvable:$true] %s781
          %s783 = sshll.u32 [#allocation21], 4
          %s784 = int_to_ptr.vmem [resolvable:$true] %s783
          %789 = dma.hbm_to_vmem [thread:$0]  %s782, 1536, %s784, [#allocation22], 128, 128, 8
        $region88: #{random_window_discriminator.1} parent=11 // pred_fallthru
          _
        // Predicated region
        $region89: #{random_window_discriminator.1} parent=11 // pred_check
          %p790 = pneg %p486
        $region90: #{random_window_discriminator.1} parent=11 // pred_check_branch
          %792 = sbr.rel (%p790) target = $region92
        $region91: #{random_window_discriminator.1} parent=11 // pred_region
          _
        $region92: #{random_window_discriminator.1} parent=11 // pred_fallthru
          _
        // Predicated region
        $region93: #{random_window_discriminator.1} parent=11 // pred_check
          %p793 = pneg %p507
        $region94: #{random_window_discriminator.1} parent=11 // pred_check_branch
          %795 = sbr.rel (%p793) target = $region96
        $region95: #{random_window_discriminator.1} parent=11 // pred_region
          _
        $region96: #{random_window_discriminator.1} parent=11 // pred_fallthru
          _
        // Predicated region
        $region97: #{random_window_discriminator.1} parent=11 // pred_check
          %p796 = pneg %p528
        $region98: #{random_window_discriminator.1} parent=11 // pred_check_branch
          %798 = sbr.rel (%p796) target = $region100
        $region99: #{random_window_discriminator.1} parent=11 // pred_region
          _
        $region100: #{random_window_discriminator.1} parent=11 // pred_fallthru
          _
        // Predicated region
        $region101: #{random_window_discriminator.1} parent=11 // pred_check
          %p799 = pneg %p549
        $region102: #{random_window_discriminator.1} parent=11 // pred_check_branch
          %801 = sbr.rel (%p799) target = $region104
        $region103: #{random_window_discriminator.1} parent=11 // pred_region
          _
        $region104: #{random_window_discriminator.1} parent=11 // pred_fallthru
          _
        // Predicated region
        $region105: #{random_window_discriminator.1} parent=11 // pred_check
          %p802 = pneg %p570
        $region106: #{random_window_discriminator.1} parent=11 // pred_check_branch
          %804 = sbr.rel (%p802) target = $region108
        $region107: #{random_window_discriminator.1} parent=11 // pred_region
          _
        $region108: #{random_window_discriminator.1} parent=11 // pred_fallthru
          _
      $region12: #{random_window_discriminator.1} parent=5 // pred_fallthru
        _
      %p805 = scmp.lt.s32.totalorder %s40, 2
      // Predicated region
      $region109: #{random_window_discriminator.1} parent=5 // pred_check
        %p806 = pneg %p805
      $region110: #{random_window_discriminator.1} parent=5 // pred_check_branch
        %808 = sbr.rel (%p806) target = $region112
      $region111: #{random_window_discriminator.1} parent=5 // pred_region
        // Predicated region
        $region113: #{random_window_discriminator.1} parent=111 // pred_check
          %p809 = pneg %p60
        $region114: #{random_window_discriminator.1} parent=111 // pred_check_branch
          %811 = sbr.rel (%p809) target = $region116
        $region115: #{random_window_discriminator.1} parent=111 // pred_region
          %p812 = scmp.lt.s32.totalorder %s40, 1
          %s813 = scalar_select %p812, %s40, 1
          %s814 = smul.addr %s813, 2
          %s815 = smul.addr %s814, 8
          %s816 = scalar_lea.vmem %s0, %s815
        $region116: #{random_window_discriminator.1} parent=111 // pred_fallthru
          _
      $region112: #{random_window_discriminator.1} parent=5 // pred_fallthru
        _
      %p817 = scmp.le.s32.totalorder 1, %s40
      %p818 = scmp.lt.s32.totalorder %s40, 3
      %p819 = pnand %p817, %p818
      %p820 = pneg %p819
      // Predicated region
      $region117: #{random_window_discriminator.1} parent=5 // pred_check
        _
      $region118: #{random_window_discriminator.1} parent=5 // pred_check_branch
        %822 = sbr.rel (%p819) target = $region120
      $region119: #{random_window_discriminator.1} parent=5 // pred_region
        %s823 = ssub.s32 %s40, 1
        // Predicated region
        $region121: #{random_window_discriminator.1} parent=119 // pred_check
          %p824 = pneg %p129
        $region122: #{random_window_discriminator.1} parent=119 // pred_check_branch
          %826 = sbr.rel (%p824) target = $region124
        $region123: #{random_window_discriminator.1} parent=119 // pred_region
          %828 = dma.done [#allocation5], 384
        $region124: #{random_window_discriminator.1} parent=119 // pred_fallthru
          _
        // Predicated region
        $region125: #{random_window_discriminator.1} parent=119 // pred_check
          %p829 = pneg %p171
        $region126: #{random_window_discriminator.1} parent=119 // pred_check_branch
          %831 = sbr.rel (%p829) target = $region128
        $region127: #{random_window_discriminator.1} parent=119 // pred_region
          %833 = dma.done [#allocation7], 384
        $region128: #{random_window_discriminator.1} parent=119 // pred_fallthru
          _
        // Predicated region
        $region129: #{random_window_discriminator.1} parent=119 // pred_check
          %p834 = pneg %p192
        $region130: #{random_window_discriminator.1} parent=119 // pred_check_branch
          %836 = sbr.rel (%p834) target = $region132
        $region131: #{random_window_discriminator.1} parent=119 // pred_region
          %838 = dma.done [#allocation7], 16
        $region132: #{random_window_discriminator.1} parent=119 // pred_fallthru
          _
        // Predicated region
        $region133: #{random_window_discriminator.1} parent=119 // pred_check
          %p839 = pneg %p213
        $region134: #{random_window_discriminator.1} parent=119 // pred_check_branch
          %841 = sbr.rel (%p839) target = $region136
        $region135: #{random_window_discriminator.1} parent=119 // pred_region
          %843 = dma.done [#allocation10], 384
        $region136: #{random_window_discriminator.1} parent=119 // pred_fallthru
          _
        // Predicated region
        $region137: #{random_window_discriminator.1} parent=119 // pred_check
          %p844 = pneg %p234
        $region138: #{random_window_discriminator.1} parent=119 // pred_check_branch
          %846 = sbr.rel (%p844) target = $region140
        $region139: #{random_window_discriminator.1} parent=119 // pred_region
          %848 = dma.done [#allocation10], 16
        $region140: #{random_window_discriminator.1} parent=119 // pred_fallthru
          _
        // Predicated region
        $region141: #{random_window_discriminator.1} parent=119 // pred_check
          %p849 = pneg %p276
        $region142: #{random_window_discriminator.1} parent=119 // pred_check_branch
          %851 = sbr.rel (%p849) target = $region144
        $region143: #{random_window_discriminator.1} parent=119 // pred_region
          %853 = dma.done [#allocation13], 16
        $region144: #{random_window_discriminator.1} parent=119 // pred_fallthru
          _
        // Predicated region
        $region145: #{random_window_discriminator.1} parent=119 // pred_check
          %p854 = pneg %p318
        $region146: #{random_window_discriminator.1} parent=119 // pred_check_branch
          %856 = sbr.rel (%p854) target = $region148
        $region147: #{random_window_discriminator.1} parent=119 // pred_region
          %858 = dma.done [#allocation13], 16
        $region148: #{random_window_discriminator.1} parent=119 // pred_fallthru
          _
        // Predicated region
        $region149: #{random_window_discriminator.1} parent=119 // pred_check
          %p859 = pneg %p339
        $region150: #{random_window_discriminator.1} parent=119 // pred_check_branch
          %861 = sbr.rel (%p859) target = $region152
        $region151: #{random_window_discriminator.1} parent=119 // pred_region
          %863 = dma.done [#allocation16], 768
        $region152: #{random_window_discriminator.1} parent=119 // pred_fallthru
          _
        // Predicated region
        $region153: #{random_window_discriminator.1} parent=119 // pred_check
          %p864 = pneg %p360
        $region154: #{random_window_discriminator.1} parent=119 // pred_check_branch
          %866 = sbr.rel (%p864) target = $region156
        $region155: #{random_window_discriminator.1} parent=119 // pred_region
          %868 = dma.done [#allocation16], 16
        $region156: #{random_window_discriminator.1} parent=119 // pred_fallthru
          _
        // Predicated region
        $region157: #{random_window_discriminator.1} parent=119 // pred_check
          %p869 = pneg %p381
        $region158: #{random_window_discriminator.1} parent=119 // pred_check_branch
          %871 = sbr.rel (%p869) target = $region160
        $region159: #{random_window_discriminator.1} parent=119 // pred_region
          %873 = dma.done [#allocation19], 768
        $region160: #{random_window_discriminator.1} parent=119 // pred_fallthru
          _
        // Predicated region
        $region161: #{random_window_discriminator.1} parent=119 // pred_check
          %p874 = pneg %p423
        $region162: #{random_window_discriminator.1} parent=119 // pred_check_branch
          %876 = sbr.rel (%p874) target = $region164
        $region163: #{random_window_discriminator.1} parent=119 // pred_region
          %878 = dma.done [#allocation19], 768
        $region164: #{random_window_discriminator.1} parent=119 // pred_fallthru
          _
        // Predicated region
        $region165: #{random_window_discriminator.1} parent=119 // pred_check
          %p879 = pneg %p465
        $region166: #{random_window_discriminator.1} parent=119 // pred_check_branch
          %881 = sbr.rel (%p879) target = $region168
        $region167: #{random_window_discriminator.1} parent=119 // pred_region
          %883 = dma.done [#allocation22], 1536
        $region168: #{random_window_discriminator.1} parent=119 // pred_fallthru
          _
        %p884 = scmp.lt.s32.totalorder %s45, 1
        %s885 = scalar_select %p884, %s45, 1
        %s886 = smul.addr %s885, 2
        %s887 = smul.addr %s886, 8
        %s888 = scalar_lea.vmem %s0, %s887
        %p889 = pneg %p66
        %p890 = pneg %p63
        %p891 = pneg %p87
        %p892 = pneg %p84
        %p893 = pneg %p108
        %p894 = pneg %p105
        %p895 = pneg %p129
        %p896 = pneg %p126
        %p897 = pneg %p150
        %p898 = pneg %p147
        %p899 = pneg %p171
        %p900 = pneg %p168
        %p901 = pneg %p192
        %p902 = pneg %p189
        %p903 = pneg %p213
        %p904 = pneg %p210
        %p905 = pneg %p234
        %p906 = pneg %p231
        %p907 = pneg %p255
        %p908 = pneg %p252
        %p909 = pneg %p276
        %p910 = pneg %p273
        %p911 = pneg %p297
        %p912 = pneg %p294
        %p913 = pneg %p318
        %p914 = pneg %p315
        %p915 = pneg %p339
        %p916 = pneg %p336
        %p917 = pneg %p360
        %p918 = pneg %p357
        %p919 = pneg %p381
        %p920 = pneg %p378
        %p921 = pneg %p402
        %p922 = pneg %p399
        %p923 = pneg %p423
        %p924 = pneg %p420
        %p925 = pneg %p444
        %p926 = pneg %p441
        %p927 = pneg %p465
        %p928 = pneg %p462
        %p929 = pneg %p486
        %p930 = pneg %p483
        %p931 = pneg %p507
        %p932 = pneg %p504
        %p933 = pneg %p528
        %p934 = pneg %p525
        %p935 = pneg %p549
        %p936 = pneg %p546
        %p937 = pneg %p570
        %p938 = pneg %p567
        %p939 = pneg %p596
        %p940 = pneg %p593
        %p941 = scmp.lt.s32.totalorder %s45, 1
        %s942 = scalar_select %p941, %s45, 1
        %s943 = smul.addr %s942, 4
        %s944 = scalar_lea.vmem %s25, %s943
        %p945 = scmp.lt.s32.totalorder %s45, 1
        %s946 = scalar_select %p945, %s45, 1
        %s947 = smul.addr %s946, 2
        %s948 = smul.addr %s947, 8
        %s949 = scalar_lea.vmem %s0, %s948
        %p950 = scmp.lt.s32.totalorder %s45, 1
        %s951 = scalar_select %p950, %s45, 1
        %s952 = smul.addr %s951, 4
        %s953 = scalar_lea.vmem %s25, %s952
        %v954 = vld [vmem:[%s949] sm:$0xff]
        %v955 = vld [vmem:[%s949 + $0x8] sm:$0xff]
        %v956 = vld [vmem:[%s1] sm:$0xf]
        %v957 = vld [vmem:[%s2] sm:$0x1]
        %v959 = vperm.slane %v957, 0
        %vm961 = vcmask 31744
        %v963 = vsel %vm961, %v954, 0
        %v966 = vsel %vm961, %v955, 0
        %vm968 = vcmask 1043456
        %v970 = vsel %vm968, %v956, 0
        %972 = vmatpush.msra.mxu0 0.0
        %973 = vmatpush.msra.mxu0 0.0
        %974 = vmatpush.msra.mxu0 0.0
        %975 = vmatpush.msra.mxu0 0.0
        %976 = vmatpush.msra.mxu0 0.0
        %977 = vmatpush.msra.mxu0 0.0
        %978 = vmatpush.msra.mxu0 0.0
        %979 = vmatpush.msra.mxu0 0.0
        %980 = vmatpush.msra.mxu0 0.0
        %981 = vmatpush.msra.mxu0 0.0
        %982 = vmatpush.msra.mxu0 0.0
        %983 = vmatpush.msra.mxu0 0.0
        %984 = vmatpush.msra.mxu0 0.0
        %985 = vmatpush.msra.mxu0 0.0
        %986 = vmatpush.msra.mxu0 0.0
        %987 = vmatpush.msra.mxu0 %v970
        %988 = vmatmul.f32.gmra.mxu0 %v963
        %v989 = vpop.f32.mrf.mxu0
        %v990 = vadd.f32 %v959, %v989
        %991 = vmatmul.f32.gmra.mxu0 %v966
        %v992 = vpop.f32.mrf.mxu0
        %v993 = vadd.f32 %v959, %v992
        %994 = vdwg.mxu0
        %vm995 = vcmp.ge.f32.partialorder %v990, 0.0
        %vm996 = vcmp.ge.f32.partialorder %v993, 0.0
        %v997 = vmul.f32 %v990, 0.2
        %v998 = vmul.f32 %v993, 0.2
        %v999 = vsel %vm995, %v990, %v997
        %v1000 = vsel %vm996, %v993, %v998
        %vm1003 = vcmask 1040384
        %v1004 = vrot.slane %v999, 7
        %v1005 = vrot.slane %v1000, 7
        %v1006 = vsel %vm1003, %v1004, %v1005
        %v1009 = vsel %vm1003, 0.0, %v1004
        %v1010 = vsel %vm1003, %v1005, 0.0
        %v1011 = vld [vmem:[#allocation4] sm:$0xff]
        %s1012 = scalar_lea.vmem [#allocation4], 8
        %v1013 = vld [vmem:[%s1012] sm:$0xff]
        %vm1016 = vcmask 1046528
        %v1017 = vrot.slane %v1009, 1
        %v1018 = vrot.slane %v1006, 1
        %v1019 = vsel %vm1016, %v1017, %v1018
        %v1020 = vrot.slane %v1010, 1
        %v1021 = vsel %vm1016, %v1018, %v1020
        %vm1022 = vcmask 64512
        %v1023 = vsel %vm1022, %v1019, 0
        %v1025 = vsel %vm1022, %v1021, 0
        %1027 = vmatpush.msra.mxu0 0.0
        %1028 = vmatpush.msra.mxu0 0.0
        %1029 = vmatpush.msra.mxu0 0.0
        %1030 = vmatpush.msra.mxu0 0.0
        %1031 = vmatpush.msra.mxu0 0.0
        %1032 = vmatpush.msra.mxu0 0.0
        %1033 = vmatpush.msra.mxu0 0.0
        %1034 = vmatpush.msra.mxu0 0.0
        %1035 = vmatpush.msra.mxu0 0.0
        %1036 = vmatpush.msra.mxu0 0.0
        %1037 = vmatpush.msra.mxu0 0.0
        %1038 = vmatpush.msra.mxu0 0.0
        %1039 = vmatpush.msra.mxu0 0.0
        %1040 = vmatpush.msra.mxu0 0.0
        %1041 = vmatpush.msra.mxu0 0.0
        %1042 = vmatpush.msra.mxu0 %v1013
        %1043 = vmatmul.f32.gmra.mxu0 %v1023
        %v1044 = vpop.f32.mrf.mxu0
        %v1045 = vadd.f32 0.0, %v1044
        %1046 = vmatmul.f32.gmra.mxu0 %v1025
        %v1047 = vpop.f32.mrf.mxu0
        %v1048 = vadd.f32 0.0, %v1047
        %1049 = vdwg.mxu0
        %v1050 = vsel %vm1022, %v1009, 0
        %v1052 = vsel %vm1022, %v1006, 0
        %1054 = vmatpush.msra.mxu0 0.0
        %1055 = vmatpush.msra.mxu0 0.0
        %1056 = vmatpush.msra.mxu0 0.0
        %1057 = vmatpush.msra.mxu0 0.0
        %1058 = vmatpush.msra.mxu0 0.0
        %1059 = vmatpush.msra.mxu0 0.0
        %1060 = vmatpush.msra.mxu0 0.0
        %1061 = vmatpush.msra.mxu0 0.0
        %1062 = vmatpush.msra.mxu0 0.0
        %1063 = vmatpush.msra.mxu0 0.0
        %1064 = vmatpush.msra.mxu0 0.0
        %1065 = vmatpush.msra.mxu0 0.0
        %1066 = vmatpush.msra.mxu0 0.0
        %1067 = vmatpush.msra.mxu0 0.0
        %1068 = vmatpush.msra.mxu0 0.0
        %1069 = vmatpush.msra.mxu0 %v1011
        %1070 = vmatmul.f32.gmra.mxu0 %v1050
        %v1071 = vpop.f32.mrf.mxu0
        %v1072 = vadd.f32 %v1045, %v1071
        %1073 = vmatmul.f32.gmra.mxu0 %v1052
        %v1074 = vpop.f32.mrf.mxu0
        %v1075 = vadd.f32 %v1048, %v1074
        %1076 = vdwg.mxu0
        %s1077 = scalar_lea.vmem [#allocation4], 16
        %v1078 = vld [vmem:[%s1077] sm:$0xff]
        %vm1079 = vcmask 1045504
        %v1080 = vrot.slane %v1009, 2
        %v1081 = vrot.slane %v1006, 2
        %v1082 = vsel %vm1079, %v1080, %v1081
        %v1083 = vrot.slane %v1010, 2
        %v1084 = vsel %vm1079, %v1081, %v1083
        %v1085 = vsel %vm1022, %v1082, 0
        %v1087 = vsel %vm1022, %v1084, 0
        %1089 = vmatpush.msra.mxu0 0.0
        %1090 = vmatpush.msra.mxu0 0.0
        %1091 = vmatpush.msra.mxu0 0.0
        %1092 = vmatpush.msra.mxu0 0.0
        %1093 = vmatpush.msra.mxu0 0.0
        %1094 = vmatpush.msra.mxu0 0.0
        %1095 = vmatpush.msra.mxu0 0.0
        %1096 = vmatpush.msra.mxu0 0.0
        %1097 = vmatpush.msra.mxu0 0.0
        %1098 = vmatpush.msra.mxu0 0.0
        %1099 = vmatpush.msra.mxu0 0.0
        %1100 = vmatpush.msra.mxu0 0.0
        %1101 = vmatpush.msra.mxu0 0.0
        %1102 = vmatpush.msra.mxu0 0.0
        %1103 = vmatpush.msra.mxu0 0.0
        %1104 = vmatpush.msra.mxu0 %v1078
        %1105 = vmatmul.f32.gmra.mxu0 %v1085
        %v1106 = vpop.f32.mrf.mxu0
        %v1107 = vadd.f32 0.0, %v1106
        %1108 = vmatmul.f32.gmra.mxu0 %v1087
        %v1109 = vpop.f32.mrf.mxu0
        %v1110 = vadd.f32 0.0, %v1109
        %1111 = vdwg.mxu0
        %v1112 = vadd.f32 %v1072, %v1107
        %v1113 = vadd.f32 %v1075, %v1110
        %v1114 = vld [vmem:[%s4] sm:$0x1]
        %v1116 = vperm.slane %v1114, 0
        %v1118 = vadd.f32 %v1112, %v1116
        %v1119 = vadd.f32 %v1113, %v1116
        %vm1120 = vcmp.ge.f32.partialorder %v1118, 0.0
        %vm1121 = vcmp.ge.f32.partialorder %v1119, 0.0
        %v1122 = vmul.f32 %v1118, 0.2
        %v1123 = vmul.f32 %v1119, 0.2
        %v1124 = vsel %vm1120, %v1118, %v1122
        %v1125 = vsel %vm1121, %v1119, %v1123
        %v1128 = vrot.slane %v1124, 7
        %v1129 = vrot.slane %v1125, 7
        %v1130 = vsel %vm1003, %v1128, %v1129
        %v1133 = vsel %vm1003, 0.0, %v1128
        %v1134 = vsel %vm1003, %v1129, 0.0
        %v1135 = vld [vmem:[#allocation6] sm:$0xff]
        %s1136 = scalar_lea.vmem [#allocation6], 8
        %v1137 = vld [vmem:[%s1136] sm:$0xff]
        %v1140 = vrot.slane %v1133, 1
        %v1141 = vrot.slane %v1130, 1
        %v1142 = vsel %vm1016, %v1140, %v1141
        %v1143 = vrot.slane %v1134, 1
        %v1144 = vsel %vm1016, %v1141, %v1143
        %v1145 = vsel %vm1022, %v1142, 0
        %v1147 = vsel %vm1022, %v1144, 0
        %1149 = vmatpush.msra.mxu0 0.0
        %1150 = vmatpush.msra.mxu0 0.0
        %1151 = vmatpush.msra.mxu0 0.0
        %1152 = vmatpush.msra.mxu0 0.0
        %1153 = vmatpush.msra.mxu0 0.0
        %1154 = vmatpush.msra.mxu0 0.0
        %1155 = vmatpush.msra.mxu0 0.0
        %1156 = vmatpush.msra.mxu0 0.0
        %1157 = vmatpush.msra.mxu0 0.0
        %1158 = vmatpush.msra.mxu0 0.0
        %1159 = vmatpush.msra.mxu0 0.0
        %1160 = vmatpush.msra.mxu0 0.0
        %1161 = vmatpush.msra.mxu0 0.0
        %1162 = vmatpush.msra.mxu0 0.0
        %1163 = vmatpush.msra.mxu0 0.0
        %1164 = vmatpush.msra.mxu0 %v1137
        %1165 = vmatmul.f32.gmra.mxu0 %v1145
        %v1166 = vpop.f32.mrf.mxu0
        %v1167 = vadd.f32 0.0, %v1166
        %1168 = vmatmul.f32.gmra.mxu0 %v1147
        %v1169 = vpop.f32.mrf.mxu0
        %v1170 = vadd.f32 0.0, %v1169
        %1171 = vdwg.mxu0
        %v1172 = vsel %vm1022, %v1133, 0
        %v1174 = vsel %vm1022, %v1130, 0
        %1176 = vmatpush.msra.mxu0 0.0
        %1177 = vmatpush.msra.mxu0 0.0
        %1178 = vmatpush.msra.mxu0 0.0
        %1179 = vmatpush.msra.mxu0 0.0
        %1180 = vmatpush.msra.mxu0 0.0
        %1181 = vmatpush.msra.mxu0 0.0
        %1182 = vmatpush.msra.mxu0 0.0
        %1183 = vmatpush.msra.mxu0 0.0
        %1184 = vmatpush.msra.mxu0 0.0
        %1185 = vmatpush.msra.mxu0 0.0
        %1186 = vmatpush.msra.mxu0 0.0
        %1187 = vmatpush.msra.mxu0 0.0
        %1188 = vmatpush.msra.mxu0 0.0
        %1189 = vmatpush.msra.mxu0 0.0
        %1190 = vmatpush.msra.mxu0 0.0
        %1191 = vmatpush.msra.mxu0 %v1135
        %1192 = vmatmul.f32.gmra.mxu0 %v1172
        %v1193 = vpop.f32.mrf.mxu0
        %v1194 = vadd.f32 %v1167, %v1193
        %1195 = vmatmul.f32.gmra.mxu0 %v1174
        %v1196 = vpop.f32.mrf.mxu0
        %v1197 = vadd.f32 %v1170, %v1196
        %1198 = vdwg.mxu0
        %s1199 = scalar_lea.vmem [#allocation6], 16
        %v1200 = vld [vmem:[%s1199] sm:$0xff]
        %v1201 = vrot.slane %v1133, 2
        %v1202 = vrot.slane %v1130, 2
        %v1203 = vsel %vm1079, %v1201, %v1202
        %v1204 = vrot.slane %v1134, 2
        %v1205 = vsel %vm1079, %v1202, %v1204
        %v1206 = vsel %vm1022, %v1203, 0
        %v1208 = vsel %vm1022, %v1205, 0
        %1210 = vmatpush.msra.mxu0 0.0
        %1211 = vmatpush.msra.mxu0 0.0
        %1212 = vmatpush.msra.mxu0 0.0
        %1213 = vmatpush.msra.mxu0 0.0
        %1214 = vmatpush.msra.mxu0 0.0
        %1215 = vmatpush.msra.mxu0 0.0
        %1216 = vmatpush.msra.mxu0 0.0
        %1217 = vmatpush.msra.mxu0 0.0
        %1218 = vmatpush.msra.mxu0 0.0
        %1219 = vmatpush.msra.mxu0 0.0
        %1220 = vmatpush.msra.mxu0 0.0
        %1221 = vmatpush.msra.mxu0 0.0
        %1222 = vmatpush.msra.mxu0 0.0
        %1223 = vmatpush.msra.mxu0 0.0
        %1224 = vmatpush.msra.mxu0 0.0
        %1225 = vmatpush.msra.mxu0 %v1200
        %1226 = vmatmul.f32.gmra.mxu0 %v1206
        %v1227 = vpop.f32.mrf.mxu0
        %v1228 = vadd.f32 0.0, %v1227
        %1229 = vmatmul.f32.gmra.mxu0 %v1208
        %v1230 = vpop.f32.mrf.mxu0
        %v1231 = vadd.f32 0.0, %v1230
        %1232 = vdwg.mxu0
        %v1233 = vadd.f32 %v1194, %v1228
        %v1234 = vadd.f32 %v1197, %v1231
        %v1235 = vld [vmem:[#allocation8] sm:$0x1]
        %v1237 = vperm.slane %v1235, 0
        %v1239 = vadd.f32 %v1233, %v1237
        %v1240 = vadd.f32 %v1234, %v1237
        %v1241 = vadd.f32 %v990, %v1239
        %v1242 = vadd.f32 %v993, %v1240
        %1243 = vst.msk [vmem:[#allocation2] sm:$0xff] %vm1022, %v1241
        %1244 = vst.msk [vmem:[#allocation2 + $0x8] sm:$0xff] %vm1022, %v1242
        %v1245 = vld [vmem:[#allocation2] ss:$2 sm:$0xff]
        %s1246 = scalar_lea.vmem [#allocation2], 1
        %v1247 = vld [vmem:[%s1246] ss:$2 sm:$0xff]
        %v1248 = vadd.f32 %v1245, %v1247
        %v1249 = vmul.f32 %v1248, 0.5
        %v1250 = vld [vmem:[%s11] sm:$0xff]
        %v1251 = vld [vmem:[#allocation14] sm:$0x1]
        %v1253 = vperm.slane %v1251, 0
        %v1256 = vsel %vm1022, %v1249, 0
        %1258 = vmatpush.msra.mxu0 0.0
        %1259 = vmatpush.msra.mxu0 0.0
        %1260 = vmatpush.msra.mxu0 0.0
        %1261 = vmatpush.msra.mxu0 0.0
        %1262 = vmatpush.msra.mxu0 0.0
        %1263 = vmatpush.msra.mxu0 0.0
        %1264 = vmatpush.msra.mxu0 0.0
        %1265 = vmatpush.msra.mxu0 0.0
        %1266 = vmatpush.msra.mxu0 0.0
        %1267 = vmatpush.msra.mxu0 0.0
        %1268 = vmatpush.msra.mxu0 0.0
        %1269 = vmatpush.msra.mxu0 0.0
        %1270 = vmatpush.msra.mxu0 0.0
        %1271 = vmatpush.msra.mxu0 0.0
        %1272 = vmatpush.msra.mxu0 0.0
        %1273 = vmatpush.msra.mxu0 %v1250
        %1274 = vmatmul.f32.gmra.mxu0 %v1256
        %v1275 = vpop.f32.mrf.mxu0
        %v1276 = vadd.f32 %v1253, %v1275
        %1277 = vdwg.mxu0
        %vm1278 = vcmp.ge.f32.partialorder %v1241, 0.0
        %vm1279 = vcmp.ge.f32.partialorder %v1242, 0.0
        %v1280 = vmul.f32 %v1241, 0.2
        %v1281 = vmul.f32 %v1242, 0.2
        %v1282 = vsel %vm1278, %v1241, %v1280
        %v1283 = vsel %vm1279, %v1242, %v1281
        %v1286 = vrot.slane %v1282, 7
        %v1287 = vrot.slane %v1283, 7
        %v1288 = vsel %vm1003, %v1286, %v1287
        %v1291 = vsel %vm1003, 0.0, %v1286
        %v1292 = vsel %vm1003, %v1287, 0.0
        %v1293 = vld [vmem:[#allocation9] sm:$0xff]
        %s1294 = scalar_lea.vmem [#allocation9], 8
        %v1295 = vld [vmem:[%s1294] sm:$0xff]
        %v1298 = vrot.slane %v1291, 1
        %v1299 = vrot.slane %v1288, 1
        %v1300 = vsel %vm1016, %v1298, %v1299
        %v1301 = vrot.slane %v1292, 1
        %v1302 = vsel %vm1016, %v1299, %v1301
        %v1303 = vsel %vm1022, %v1300, 0
        %v1305 = vsel %vm1022, %v1302, 0
        %1307 = vmatpush.msra.mxu0 0.0
        %1308 = vmatpush.msra.mxu0 0.0
        %1309 = vmatpush.msra.mxu0 0.0
        %1310 = vmatpush.msra.mxu0 0.0
        %1311 = vmatpush.msra.mxu0 0.0
        %1312 = vmatpush.msra.mxu0 0.0
        %1313 = vmatpush.msra.mxu0 0.0
        %1314 = vmatpush.msra.mxu0 0.0
        %1315 = vmatpush.msra.mxu0 0.0
        %1316 = vmatpush.msra.mxu0 0.0
        %1317 = vmatpush.msra.mxu0 0.0
        %1318 = vmatpush.msra.mxu0 0.0
        %1319 = vmatpush.msra.mxu0 0.0
        %1320 = vmatpush.msra.mxu0 0.0
        %1321 = vmatpush.msra.mxu0 0.0
        %1322 = vmatpush.msra.mxu0 %v1295
        %1323 = vmatmul.f32.gmra.mxu0 %v1303
        %v1324 = vpop.f32.mrf.mxu0
        %v1325 = vadd.f32 0.0, %v1324
        %1326 = vmatmul.f32.gmra.mxu0 %v1305
        %v1327 = vpop.f32.mrf.mxu0
        %v1328 = vadd.f32 0.0, %v1327
        %1329 = vdwg.mxu0
        %v1330 = vsel %vm1022, %v1291, 0
        %v1332 = vsel %vm1022, %v1288, 0
        %1334 = vmatpush.msra.mxu0 0.0
        %1335 = vmatpush.msra.mxu0 0.0
        %1336 = vmatpush.msra.mxu0 0.0
        %1337 = vmatpush.msra.mxu0 0.0
        %1338 = vmatpush.msra.mxu0 0.0
        %1339 = vmatpush.msra.mxu0 0.0
        %1340 = vmatpush.msra.mxu0 0.0
        %1341 = vmatpush.msra.mxu0 0.0
        %1342 = vmatpush.msra.mxu0 0.0
        %1343 = vmatpush.msra.mxu0 0.0
        %1344 = vmatpush.msra.mxu0 0.0
        %1345 = vmatpush.msra.mxu0 0.0
        %1346 = vmatpush.msra.mxu0 0.0
        %1347 = vmatpush.msra.mxu0 0.0
        %1348 = vmatpush.msra.mxu0 0.0
        %1349 = vmatpush.msra.mxu0 %v1293
        %1350 = vmatmul.f32.gmra.mxu0 %v1330
        %v1351 = vpop.f32.mrf.mxu0
        %v1352 = vadd.f32 %v1325, %v1351
        %1353 = vmatmul.f32.gmra.mxu0 %v1332
        %v1354 = vpop.f32.mrf.mxu0
        %v1355 = vadd.f32 %v1328, %v1354
        %1356 = vdwg.mxu0
        %s1357 = scalar_lea.vmem [#allocation9], 16
        %v1358 = vld [vmem:[%s1357] sm:$0xff]
        %v1359 = vrot.slane %v1291, 2
        %v1360 = vrot.slane %v1288, 2
        %v1361 = vsel %vm1079, %v1359, %v1360
        %v1362 = vrot.slane %v1292, 2
        %v1363 = vsel %vm1079, %v1360, %v1362
        %v1364 = vsel %vm1022, %v1361, 0
        %v1366 = vsel %vm1022, %v1363, 0
        %1368 = vmatpush.msra.mxu0 0.0
        %1369 = vmatpush.msra.mxu0 0.0
        %1370 = vmatpush.msra.mxu0 0.0
        %1371 = vmatpush.msra.mxu0 0.0
        %1372 = vmatpush.msra.mxu0 0.0
        %1373 = vmatpush.msra.mxu0 0.0
        %1374 = vmatpush.msra.mxu0 0.0
        %1375 = vmatpush.msra.mxu0 0.0
        %1376 = vmatpush.msra.mxu0 0.0
        %1377 = vmatpush.msra.mxu0 0.0
        %1378 = vmatpush.msra.mxu0 0.0
        %1379 = vmatpush.msra.mxu0 0.0
        %1380 = vmatpush.msra.mxu0 0.0
        %1381 = vmatpush.msra.mxu0 0.0
        %1382 = vmatpush.msra.mxu0 0.0
        %1383 = vmatpush.msra.mxu0 %v1358
        %1384 = vmatmul.f32.gmra.mxu0 %v1364
        %v1385 = vpop.f32.mrf.mxu0
        %v1386 = vadd.f32 0.0, %v1385
        %1387 = vmatmul.f32.gmra.mxu0 %v1366
        %v1388 = vpop.f32.mrf.mxu0
        %v1389 = vadd.f32 0.0, %v1388
        %1390 = vdwg.mxu0
        %v1391 = vadd.f32 %v1352, %v1386
        %v1392 = vadd.f32 %v1355, %v1389
        %v1393 = vld [vmem:[#allocation11] sm:$0x1]
        %v1395 = vperm.slane %v1393, 0
        %v1397 = vadd.f32 %v1391, %v1395
        %v1398 = vadd.f32 %v1392, %v1395
        %vm1399 = vcmask 130048
        %1400 = vst.msk [vmem:[#allocation2] sm:$0xff] %vm1399, %v1397
        %1401 = vst.msk [vmem:[#allocation2 + $0x8] sm:$0xff] %vm1399, %v1398
        %v1402 = vld [vmem:[#allocation2] ss:$2 sm:$0xff]
        %v1403 = vld [vmem:[%s1246] ss:$2 sm:$0xff]
        %v1404 = vadd.f32 %v1402, %v1403
        %v1405 = vmul.f32 %v1404, 0.5
        %vm1406 = vcmp.ge.f32.partialorder %v1405, 0.0
        %v1407 = vmul.f32 %v1405, 0.2
        %v1408 = vsel %vm1406, %v1405, %v1407
        %v1410 = vrot.slane %v1408, 7
        %v1412 = vsel %vm1003, 0.0, %v1410
        %v1413 = vsel %vm1003, %v1410, 0.0
        %v1414 = vld [vmem:[%s9] sm:$0xff]
        %v1415 = vld [vmem:[%s9 + $0x8] sm:$0xff]
        %s1416 = scalar_lea.vmem %s9, 16
        %v1417 = vld [vmem:[%s1416] sm:$0xff]
        %v1418 = vld [vmem:[%s1416 + $0x8] sm:$0xff]
        %v1421 = vrot.slane %v1412, 1
        %v1422 = vrot.slane %v1413, 1
        %v1423 = vsel %vm1016, %v1421, %v1422
        %v1424 = vsel %vm1399, %v1423, 0
        %1426 = vmatpush.msra.mxu0 0.0
        %1427 = vmatpush.msra.mxu0 0.0
        %1428 = vmatpush.msra.mxu0 0.0
        %1429 = vmatpush.msra.mxu0 0.0
        %1430 = vmatpush.msra.mxu0 0.0
        %1431 = vmatpush.msra.mxu0 0.0
        %1432 = vmatpush.msra.mxu0 0.0
        %1433 = vmatpush.msra.mxu0 0.0
        %1434 = vmatpush.msra.mxu0 0.0
        %1435 = vmatpush.msra.mxu0 0.0
        %1436 = vmatpush.msra.mxu0 0.0
        %1437 = vmatpush.msra.mxu0 0.0
        %1438 = vmatpush.msra.mxu0 0.0
        %1439 = vmatpush.msra.mxu0 0.0
        %1440 = vmatpush.msra.mxu0 %v1418
        %1441 = vmatpush.msra.mxu0 %v1417
        %1442 = vmatmul.f32.gmra.mxu0 %v1424
        %v1443 = vpop.f32.mrf.mxu0
        %v1444 = vadd.f32 0.0, %v1443
        %1445 = vdwg.mxu0
        %v1446 = vsel %vm1399, %v1412, 0
        %1448 = vmatpush.msra.mxu0 0.0
        %1449 = vmatpush.msra.mxu0 0.0
        %1450 = vmatpush.msra.mxu0 0.0
        %1451 = vmatpush.msra.mxu0 0.0
        %1452 = vmatpush.msra.mxu0 0.0
        %1453 = vmatpush.msra.mxu0 0.0
        %1454 = vmatpush.msra.mxu0 0.0
        %1455 = vmatpush.msra.mxu0 0.0
        %1456 = vmatpush.msra.mxu0 0.0
        %1457 = vmatpush.msra.mxu0 0.0
        %1458 = vmatpush.msra.mxu0 0.0
        %1459 = vmatpush.msra.mxu0 0.0
        %1460 = vmatpush.msra.mxu0 0.0
        %1461 = vmatpush.msra.mxu0 0.0
        %1462 = vmatpush.msra.mxu0 %v1415
        %1463 = vmatpush.msra.mxu0 %v1414
        %1464 = vmatmul.f32.gmra.mxu0 %v1446
        %v1465 = vpop.f32.mrf.mxu0
        %v1466 = vadd.f32 %v1444, %v1465
        %1467 = vdwg.mxu0
        %s1468 = scalar_lea.vmem %s9, 32
        %v1469 = vld [vmem:[%s1468] sm:$0xff]
        %v1470 = vld [vmem:[%s1468 + $0x8] sm:$0xff]
        %v1471 = vrot.slane %v1412, 2
        %v1472 = vrot.slane %v1413, 2
        %v1473 = vsel %vm1079, %v1471, %v1472
        %v1474 = vsel %vm1399, %v1473, 0
        %1476 = vmatpush.msra.mxu0 0.0
        %1477 = vmatpush.msra.mxu0 0.0
        %1478 = vmatpush.msra.mxu0 0.0
        %1479 = vmatpush.msra.mxu0 0.0
        %1480 = vmatpush.msra.mxu0 0.0
        %1481 = vmatpush.msra.mxu0 0.0
        %1482 = vmatpush.msra.mxu0 0.0
        %1483 = vmatpush.msra.mxu0 0.0
        %1484 = vmatpush.msra.mxu0 0.0
        %1485 = vmatpush.msra.mxu0 0.0
        %1486 = vmatpush.msra.mxu0 0.0
        %1487 = vmatpush.msra.mxu0 0.0
        %1488 = vmatpush.msra.mxu0 0.0
        %1489 = vmatpush.msra.mxu0 0.0
        %1490 = vmatpush.msra.mxu0 %v1470
        %1491 = vmatpush.msra.mxu0 %v1469
        %1492 = vmatmul.f32.gmra.mxu0 %v1474
        %v1493 = vpop.f32.mrf.mxu0
        %v1494 = vadd.f32 0.0, %v1493
        %1495 = vdwg.mxu0
        %v1496 = vadd.f32 %v1466, %v1494
        %v1497 = vld [vmem:[#allocation12] sm:$0x1]
        %v1499 = vperm.slane %v1497, 0
        %v1501 = vadd.f32 %v1496, %v1499
        %v1502 = vadd.f32 %v1276, %v1501
        %vm1503 = vcmp.ge.f32.partialorder %v1502, 0.0
        %v1504 = vmul.f32 %v1502, 0.2
        %v1505 = vsel %vm1503, %v1502, %v1504
        %v1507 = vrot.slane %v1505, 7
        %v1509 = vsel %vm1003, 0.0, %v1507
        %v1510 = vsel %vm1003, %v1507, 0.0
        %v1511 = vld [vmem:[#allocation15] sm:$0xff]
        %v1512 = vld [vmem:[#allocation15 + $0x8] sm:$0xff]
        %s1513 = scalar_lea.vmem [#allocation15], 16
        %v1514 = vld [vmem:[%s1513] sm:$0xff]
        %v1515 = vld [vmem:[%s1513 + $0x8] sm:$0xff]
        %v1518 = vrot.slane %v1509, 1
        %v1519 = vrot.slane %v1510, 1
        %v1520 = vsel %vm1016, %v1518, %v1519
        %v1521 = vsel %vm1399, %v1520, 0
        %1523 = vmatpush.msra.mxu0 0.0
        %1524 = vmatpush.msra.mxu0 0.0
        %1525 = vmatpush.msra.mxu0 0.0
        %1526 = vmatpush.msra.mxu0 0.0
        %1527 = vmatpush.msra.mxu0 0.0
        %1528 = vmatpush.msra.mxu0 0.0
        %1529 = vmatpush.msra.mxu0 0.0
        %1530 = vmatpush.msra.mxu0 0.0
        %1531 = vmatpush.msra.mxu0 0.0
        %1532 = vmatpush.msra.mxu0 0.0
        %1533 = vmatpush.msra.mxu0 0.0
        %1534 = vmatpush.msra.mxu0 0.0
        %1535 = vmatpush.msra.mxu0 0.0
        %1536 = vmatpush.msra.mxu0 0.0
        %1537 = vmatpush.msra.mxu0 %v1515
        %1538 = vmatpush.msra.mxu0 %v1514
        %1539 = vmatmul.f32.gmra.mxu0 %v1521
        %v1540 = vpop.f32.mrf.mxu0
        %v1541 = vadd.f32 0.0, %v1540
        %1542 = vdwg.mxu0
        %v1543 = vsel %vm1399, %v1509, 0
        %1545 = vmatpush.msra.mxu0 0.0
        %1546 = vmatpush.msra.mxu0 0.0
        %1547 = vmatpush.msra.mxu0 0.0
        %1548 = vmatpush.msra.mxu0 0.0
        %1549 = vmatpush.msra.mxu0 0.0
        %1550 = vmatpush.msra.mxu0 0.0
        %1551 = vmatpush.msra.mxu0 0.0
        %1552 = vmatpush.msra.mxu0 0.0
        %1553 = vmatpush.msra.mxu0 0.0
        %1554 = vmatpush.msra.mxu0 0.0
        %1555 = vmatpush.msra.mxu0 0.0
        %1556 = vmatpush.msra.mxu0 0.0
        %1557 = vmatpush.msra.mxu0 0.0
        %1558 = vmatpush.msra.mxu0 0.0
        %1559 = vmatpush.msra.mxu0 %v1512
        %1560 = vmatpush.msra.mxu0 %v1511
        %1561 = vmatmul.f32.gmra.mxu0 %v1543
        %v1562 = vpop.f32.mrf.mxu0
        %v1563 = vadd.f32 %v1541, %v1562
        %1564 = vdwg.mxu0
        %s1565 = scalar_lea.vmem [#allocation15], 32
        %v1566 = vld [vmem:[%s1565] sm:$0xff]
        %v1567 = vld [vmem:[%s1565 + $0x8] sm:$0xff]
        %v1568 = vrot.slane %v1509, 2
        %v1569 = vrot.slane %v1510, 2
        %v1570 = vsel %vm1079, %v1568, %v1569
        %v1571 = vsel %vm1399, %v1570, 0
        %1573 = vmatpush.msra.mxu0 0.0
        %1574 = vmatpush.msra.mxu0 0.0
        %1575 = vmatpush.msra.mxu0 0.0
        %1576 = vmatpush.msra.mxu0 0.0
        %1577 = vmatpush.msra.mxu0 0.0
        %1578 = vmatpush.msra.mxu0 0.0
        %1579 = vmatpush.msra.mxu0 0.0
        %1580 = vmatpush.msra.mxu0 0.0
        %1581 = vmatpush.msra.mxu0 0.0
        %1582 = vmatpush.msra.mxu0 0.0
        %1583 = vmatpush.msra.mxu0 0.0
        %1584 = vmatpush.msra.mxu0 0.0
        %1585 = vmatpush.msra.mxu0 0.0
        %1586 = vmatpush.msra.mxu0 0.0
        %1587 = vmatpush.msra.mxu0 %v1567
        %1588 = vmatpush.msra.mxu0 %v1566
        %1589 = vmatmul.f32.gmra.mxu0 %v1571
        %v1590 = vpop.f32.mrf.mxu0
        %v1591 = vadd.f32 0.0, %v1590
        %1592 = vdwg.mxu0
        %v1593 = vadd.f32 %v1563, %v1591
        %v1594 = vld [vmem:[#allocation17] sm:$0x1]
        %v1596 = vperm.slane %v1594, 0
        %v1598 = vadd.f32 %v1593, %v1596
        %vm1599 = vcmp.ge.f32.partialorder %v1598, 0.0
        %v1600 = vmul.f32 %v1598, 0.2
        %v1601 = vsel %vm1599, %v1598, %v1600
        %v1603 = vrot.slane %v1601, 7
        %v1605 = vsel %vm1003, 0.0, %v1603
        %v1606 = vsel %vm1003, %v1603, 0.0
        %v1607 = vld [vmem:[#allocation18] sm:$0xff]
        %v1608 = vld [vmem:[#allocation18 + $0x8] sm:$0xff]
        %s1609 = scalar_lea.vmem [#allocation18], 16
        %v1610 = vld [vmem:[%s1609] sm:$0xff]
        %v1611 = vld [vmem:[%s1609 + $0x8] sm:$0xff]
        %v1614 = vrot.slane %v1605, 1
        %v1615 = vrot.slane %v1606, 1
        %v1616 = vsel %vm1016, %v1614, %v1615
        %v1617 = vsel %vm1399, %v1616, 0
        %1619 = vmatpush.msra.mxu0 0.0
        %1620 = vmatpush.msra.mxu0 0.0
        %1621 = vmatpush.msra.mxu0 0.0
        %1622 = vmatpush.msra.mxu0 0.0
        %1623 = vmatpush.msra.mxu0 0.0
        %1624 = vmatpush.msra.mxu0 0.0
        %1625 = vmatpush.msra.mxu0 0.0
        %1626 = vmatpush.msra.mxu0 0.0
        %1627 = vmatpush.msra.mxu0 0.0
        %1628 = vmatpush.msra.mxu0 0.0
        %1629 = vmatpush.msra.mxu0 0.0
        %1630 = vmatpush.msra.mxu0 0.0
        %1631 = vmatpush.msra.mxu0 0.0
        %1632 = vmatpush.msra.mxu0 0.0
        %1633 = vmatpush.msra.mxu0 %v1611
        %1634 = vmatpush.msra.mxu0 %v1610
        %1635 = vmatmul.f32.gmra.mxu0 %v1617
        %v1636 = vpop.f32.mrf.mxu0
        %v1637 = vadd.f32 0.0, %v1636
        %1638 = vdwg.mxu0
        %v1639 = vsel %vm1399, %v1605, 0
        %1641 = vmatpush.msra.mxu0 0.0
        %1642 = vmatpush.msra.mxu0 0.0
        %1643 = vmatpush.msra.mxu0 0.0
        %1644 = vmatpush.msra.mxu0 0.0
        %1645 = vmatpush.msra.mxu0 0.0
        %1646 = vmatpush.msra.mxu0 0.0
        %1647 = vmatpush.msra.mxu0 0.0
        %1648 = vmatpush.msra.mxu0 0.0
        %1649 = vmatpush.msra.mxu0 0.0
        %1650 = vmatpush.msra.mxu0 0.0
        %1651 = vmatpush.msra.mxu0 0.0
        %1652 = vmatpush.msra.mxu0 0.0
        %1653 = vmatpush.msra.mxu0 0.0
        %1654 = vmatpush.msra.mxu0 0.0
        %1655 = vmatpush.msra.mxu0 %v1608
        %1656 = vmatpush.msra.mxu0 %v1607
        %1657 = vmatmul.f32.gmra.mxu0 %v1639
        %v1658 = vpop.f32.mrf.mxu0
        %v1659 = vadd.f32 %v1637, %v1658
        %1660 = vdwg.mxu0
        %s1661 = scalar_lea.vmem [#allocation18], 32
        %v1662 = vld [vmem:[%s1661] sm:$0xff]
        %v1663 = vld [vmem:[%s1661 + $0x8] sm:$0xff]
        %v1664 = vrot.slane %v1605, 2
        %v1665 = vrot.slane %v1606, 2
        %v1666 = vsel %vm1079, %v1664, %v1665
        %v1667 = vsel %vm1399, %v1666, 0
        %1669 = vmatpush.msra.mxu0 0.0
        %1670 = vmatpush.msra.mxu0 0.0
        %1671 = vmatpush.msra.mxu0 0.0
        %1672 = vmatpush.msra.mxu0 0.0
        %1673 = vmatpush.msra.mxu0 0.0
        %1674 = vmatpush.msra.mxu0 0.0
        %1675 = vmatpush.msra.mxu0 0.0
        %1676 = vmatpush.msra.mxu0 0.0
        %1677 = vmatpush.msra.mxu0 0.0
        %1678 = vmatpush.msra.mxu0 0.0
        %1679 = vmatpush.msra.mxu0 0.0
        %1680 = vmatpush.msra.mxu0 0.0
        %1681 = vmatpush.msra.mxu0 0.0
        %1682 = vmatpush.msra.mxu0 0.0
        %1683 = vmatpush.msra.mxu0 %v1663
        %1684 = vmatpush.msra.mxu0 %v1662
        %1685 = vmatmul.f32.gmra.mxu0 %v1667
        %v1686 = vpop.f32.mrf.mxu0
        %v1687 = vadd.f32 0.0, %v1686
        %1688 = vdwg.mxu0
        %v1689 = vadd.f32 %v1659, %v1687
        %v1690 = vld [vmem:[%s16] sm:$0x1]
        %v1692 = vperm.slane %v1690, 0
        %v1694 = vadd.f32 %v1689, %v1692
        %v1695 = vadd.f32 %v1502, %v1694
        %1696 = vst.msk [vmem:[#allocation2] sm:$0xff] %vm1399, %v1695
        %v1697 = vld [vmem:[#allocation2] ss:$2 sm:$0xf]
        %v1698 = vld [vmem:[%s1246] ss:$2 sm:$0xf]
        %v1699 = vadd.f32 %v1697, %v1698
        %v1700 = vmul.f32 %v1699, 0.5
        %v1701 = vld [vmem:[%s21] sm:$0xff]
        %v1702 = vld [vmem:[%s21 + $0x8] sm:$0xff]
        %v1703 = vld [vmem:[%s22] sm:$0x1]
        %v1705 = vperm.slane %v1703, 0
        %v1708 = vsel %vm1399, %v1700, 0
        %1710 = vmatpush.msra.mxu0 0.0
        %1711 = vmatpush.msra.mxu0 0.0
        %1712 = vmatpush.msra.mxu0 0.0
        %1713 = vmatpush.msra.mxu0 0.0
        %1714 = vmatpush.msra.mxu0 0.0
        %1715 = vmatpush.msra.mxu0 0.0
        %1716 = vmatpush.msra.mxu0 0.0
        %1717 = vmatpush.msra.mxu0 0.0
        %1718 = vmatpush.msra.mxu0 0.0
        %1719 = vmatpush.msra.mxu0 0.0
        %1720 = vmatpush.msra.mxu0 0.0
        %1721 = vmatpush.msra.mxu0 0.0
        %1722 = vmatpush.msra.mxu0 0.0
        %1723 = vmatpush.msra.mxu0 0.0
        %1724 = vmatpush.msra.mxu0 %v1702
        %1725 = vmatpush.msra.mxu0 %v1701
        %1726 = vmatmul.f32.gmra.mxu0 %v1708
        %v1727 = vpop.f32.mrf.mxu0
        %v1728 = vadd.f32 %v1705, %v1727
        %1729 = vdwg.mxu0
        %vm1730 = vcmp.ge.f32.partialorder %v1695, 0.0
        %v1731 = vmul.f32 %v1695, 0.2
        %v1732 = vsel %vm1730, %v1695, %v1731
        %v1734 = vrot.slane %v1732, 7
        %v1736 = vsel %vm1003, 0.0, %v1734
        %v1737 = vsel %vm1003, %v1734, 0.0
        %v1738 = vld [vmem:[#allocation20] sm:$0xff]
        %v1739 = vld [vmem:[#allocation20 + $0x8] sm:$0xff]
        %s1740 = scalar_lea.vmem [#allocation20], 16
        %v1741 = vld [vmem:[%s1740] sm:$0xff]
        %v1742 = vld [vmem:[%s1740 + $0x8] sm:$0xff]
        %v1745 = vrot.slane %v1736, 1
        %v1746 = vrot.slane %v1737, 1
        %v1747 = vsel %vm1016, %v1745, %v1746
        %v1748 = vsel %vm1399, %v1747, 0
        %1750 = vmatpush.msra.mxu0 0.0
        %1751 = vmatpush.msra.mxu0 0.0
        %1752 = vmatpush.msra.mxu0 0.0
        %1753 = vmatpush.msra.mxu0 0.0
        %1754 = vmatpush.msra.mxu0 0.0
        %1755 = vmatpush.msra.mxu0 0.0
        %1756 = vmatpush.msra.mxu0 0.0
        %1757 = vmatpush.msra.mxu0 0.0
        %1758 = vmatpush.msra.mxu0 0.0
        %1759 = vmatpush.msra.mxu0 0.0
        %1760 = vmatpush.msra.mxu0 0.0
        %1761 = vmatpush.msra.mxu0 0.0
        %1762 = vmatpush.msra.mxu0 0.0
        %1763 = vmatpush.msra.mxu0 0.0
        %1764 = vmatpush.msra.mxu0 %v1742
        %1765 = vmatpush.msra.mxu0 %v1741
        %1766 = vmatmul.f32.gmra.mxu0 %v1748
        %v1767 = vpop.f32.mrf.mxu0
        %v1768 = vadd.f32 0.0, %v1767
        %1769 = vdwg.mxu0
        %v1770 = vsel %vm1399, %v1736, 0
        %1772 = vmatpush.msra.mxu0 0.0
        %1773 = vmatpush.msra.mxu0 0.0
        %1774 = vmatpush.msra.mxu0 0.0
        %1775 = vmatpush.msra.mxu0 0.0
        %1776 = vmatpush.msra.mxu0 0.0
        %1777 = vmatpush.msra.mxu0 0.0
        %1778 = vmatpush.msra.mxu0 0.0
        %1779 = vmatpush.msra.mxu0 0.0
        %1780 = vmatpush.msra.mxu0 0.0
        %1781 = vmatpush.msra.mxu0 0.0
        %1782 = vmatpush.msra.mxu0 0.0
        %1783 = vmatpush.msra.mxu0 0.0
        %1784 = vmatpush.msra.mxu0 0.0
        %1785 = vmatpush.msra.mxu0 0.0
        %1786 = vmatpush.msra.mxu0 %v1739
        %1787 = vmatpush.msra.mxu0 %v1738
        %1788 = vmatmul.f32.gmra.mxu0 %v1770
        %v1789 = vpop.f32.mrf.mxu0
        %v1790 = vadd.f32 %v1768, %v1789
        %1791 = vdwg.mxu0
        %s1792 = scalar_lea.vmem [#allocation20], 32
        %v1793 = vld [vmem:[%s1792] sm:$0xff]
        %v1794 = vld [vmem:[%s1792 + $0x8] sm:$0xff]
        %v1795 = vrot.slane %v1736, 2
        %v1796 = vrot.slane %v1737, 2
        %v1797 = vsel %vm1079, %v1795, %v1796
        %v1798 = vsel %vm1399, %v1797, 0
        %1800 = vmatpush.msra.mxu0 0.0
        %1801 = vmatpush.msra.mxu0 0.0
        %1802 = vmatpush.msra.mxu0 0.0
        %1803 = vmatpush.msra.mxu0 0.0
        %1804 = vmatpush.msra.mxu0 0.0
        %1805 = vmatpush.msra.mxu0 0.0
        %1806 = vmatpush.msra.mxu0 0.0
        %1807 = vmatpush.msra.mxu0 0.0
        %1808 = vmatpush.msra.mxu0 0.0
        %1809 = vmatpush.msra.mxu0 0.0
        %1810 = vmatpush.msra.mxu0 0.0
        %1811 = vmatpush.msra.mxu0 0.0
        %1812 = vmatpush.msra.mxu0 0.0
        %1813 = vmatpush.msra.mxu0 0.0
        %1814 = vmatpush.msra.mxu0 %v1794
        %1815 = vmatpush.msra.mxu0 %v1793
        %1816 = vmatmul.f32.gmra.mxu0 %v1798
        %v1817 = vpop.f32.mrf.mxu0
        %v1818 = vadd.f32 0.0, %v1817
        %1819 = vdwg.mxu0
        %v1820 = vadd.f32 %v1790, %v1818
        %v1821 = vld [vmem:[%s18] sm:$0x1]
        %v1823 = vperm.slane %v1821, 0
        %v1825 = vadd.f32 %v1820, %v1823
        %vm1826 = vcmask 261120
        %1827 = vst.msk [vmem:[#allocation2] sm:$0xff] %vm1826, %v1825
        %v1828 = vld [vmem:[#allocation2] ss:$2 sm:$0xf]
        %v1829 = vld [vmem:[%s1246] ss:$2 sm:$0xf]
        %v1830 = vadd.f32 %v1828, %v1829
        %v1831 = vmul.f32 %v1830, 0.5
        %vm1832 = vcmp.ge.f32.partialorder %v1831, 0.0
        %v1833 = vmul.f32 %v1831, 0.2
        %v1834 = vsel %vm1832, %v1831, %v1833
        %v1836 = vrot.slane %v1834, 7
        %v1838 = vsel %vm1003, 0.0, %v1836
        %vm1839 = vcmask 1044480
        %v1840 = vsel %vm1839, %v1838, 0.0
        %v1841 = vld [vmem:[#allocation21] sm:$0xff]
        %v1842 = vld [vmem:[#allocation21 + $0x8] sm:$0xff]
        %v1843 = vld [vmem:[#allocation21 + $0x10] sm:$0xff]
        %v1844 = vld [vmem:[#allocation21 + $0x18] sm:$0xff]
        %s1845 = scalar_lea.vmem [#allocation21], 32
        %v1846 = vld [vmem:[%s1845] sm:$0xff]
        %v1847 = vld [vmem:[%s1845 + $0x8] sm:$0xff]
        %v1848 = vld [vmem:[%s1845 + $0x10] sm:$0xff]
        %v1849 = vld [vmem:[%s1845 + $0x18] sm:$0xff]
        %v1851 = vrot.slane %v1840, 1
        %v1852 = vsel %vm1826, %v1851, 0
        %1854 = vmatpush.msra.mxu0 0.0
        %1855 = vmatpush.msra.mxu0 0.0
        %1856 = vmatpush.msra.mxu0 0.0
        %1857 = vmatpush.msra.mxu0 0.0
        %1858 = vmatpush.msra.mxu0 0.0
        %1859 = vmatpush.msra.mxu0 0.0
        %1860 = vmatpush.msra.mxu0 0.0
        %1861 = vmatpush.msra.mxu0 0.0
        %1862 = vmatpush.msra.mxu0 0.0
        %1863 = vmatpush.msra.mxu0 0.0
        %1864 = vmatpush.msra.mxu0 0.0
        %1865 = vmatpush.msra.mxu0 0.0
        %1866 = vmatpush.msra.mxu0 %v1849
        %1867 = vmatpush.msra.mxu0 %v1848
        %1868 = vmatpush.msra.mxu0 %v1847
        %1869 = vmatpush.msra.mxu0 %v1846
        %1870 = vmatmul.f32.gmra.mxu0 %v1852
        %v1871 = vpop.f32.mrf.mxu0
        %v1872 = vadd.f32 0.0, %v1871
        %1873 = vdwg.mxu0
        %v1874 = vsel %vm1826, %v1840, 0
        %1876 = vmatpush.msra.mxu0 0.0
        %1877 = vmatpush.msra.mxu0 0.0
        %1878 = vmatpush.msra.mxu0 0.0
        %1879 = vmatpush.msra.mxu0 0.0
        %1880 = vmatpush.msra.mxu0 0.0
        %1881 = vmatpush.msra.mxu0 0.0
        %1882 = vmatpush.msra.mxu0 0.0
        %1883 = vmatpush.msra.mxu0 0.0
        %1884 = vmatpush.msra.mxu0 0.0
        %1885 = vmatpush.msra.mxu0 0.0
        %1886 = vmatpush.msra.mxu0 0.0
        %1887 = vmatpush.msra.mxu0 0.0
        %1888 = vmatpush.msra.mxu0 %v1844
        %1889 = vmatpush.msra.mxu0 %v1843
        %1890 = vmatpush.msra.mxu0 %v1842
        %1891 = vmatpush.msra.mxu0 %v1841
        %1892 = vmatmul.f32.gmra.mxu0 %v1874
        %v1893 = vpop.f32.mrf.mxu0
        %v1894 = vadd.f32 %v1872, %v1893
        %1895 = vdwg.mxu0
        %s1896 = scalar_lea.vmem [#allocation21], 64
        %v1897 = vld [vmem:[%s1896] sm:$0xff]
        %v1898 = vld [vmem:[%s1896 + $0x8] sm:$0xff]
        %v1899 = vld [vmem:[%s1896 + $0x10] sm:$0xff]
        %v1900 = vld [vmem:[%s1896 + $0x18] sm:$0xff]
        %v1901 = vrot.slane %v1840, 2
        %v1902 = vsel %vm1826, %v1901, 0
        %1904 = vmatpush.msra.mxu0 0.0
        %1905 = vmatpush.msra.mxu0 0.0
        %1906 = vmatpush.msra.mxu0 0.0
        %1907 = vmatpush.msra.mxu0 0.0
        %1908 = vmatpush.msra.mxu0 0.0
        %1909 = vmatpush.msra.mxu0 0.0
        %1910 = vmatpush.msra.mxu0 0.0
        %1911 = vmatpush.msra.mxu0 0.0
        %1912 = vmatpush.msra.mxu0 0.0
        %1913 = vmatpush.msra.mxu0 0.0
        %1914 = vmatpush.msra.mxu0 0.0
        %1915 = vmatpush.msra.mxu0 0.0
        %1916 = vmatpush.msra.mxu0 %v1900
        %1917 = vmatpush.msra.mxu0 %v1899
        %1918 = vmatpush.msra.mxu0 %v1898
        %1919 = vmatpush.msra.mxu0 %v1897
        %1920 = vmatmul.f32.gmra.mxu0 %v1902
        %v1921 = vpop.f32.mrf.mxu0
        %v1922 = vadd.f32 0.0, %v1921
        %1923 = vdwg.mxu0
        %v1924 = vadd.f32 %v1894, %v1922
        %v1925 = vld [vmem:[%s20] sm:$0x1]
        %v1927 = vperm.slane %v1925, 0
        %v1929 = vadd.f32 %v1924, %v1927
        %v1930 = vadd.f32 %v1728, %v1929
        %v1931 = vld [vmem:[%s23] sm:$0xff]
        %v1932 = vld [vmem:[%s23 + $0x8] sm:$0xff]
        %v1933 = vld [vmem:[%s23 + $0x10] sm:$0xff]
        %v1934 = vld [vmem:[%s23 + $0x18] sm:$0xff]
        %v1935 = vld [vmem:[#allocation3] sm:$0x1]
        %v1937 = vperm.slane %v1935, 0
        %v1940 = vsel %vm1826, %v1930, 0
        %1942 = vmatpush.msra.mxu0 0.0
        %1943 = vmatpush.msra.mxu0 0.0
        %1944 = vmatpush.msra.mxu0 0.0
        %1945 = vmatpush.msra.mxu0 0.0
        %1946 = vmatpush.msra.mxu0 0.0
        %1947 = vmatpush.msra.mxu0 0.0
        %1948 = vmatpush.msra.mxu0 0.0
        %1949 = vmatpush.msra.mxu0 0.0
        %1950 = vmatpush.msra.mxu0 0.0
        %1951 = vmatpush.msra.mxu0 0.0
        %1952 = vmatpush.msra.mxu0 0.0
        %1953 = vmatpush.msra.mxu0 0.0
        %1954 = vmatpush.msra.mxu0 %v1934
        %1955 = vmatpush.msra.mxu0 %v1933
        %1956 = vmatpush.msra.mxu0 %v1932
        %1957 = vmatpush.msra.mxu0 %v1931
        %1958 = vmatmul.f32.gmra.mxu0 %v1940
        %v1959 = vpop.f32.mrf.mxu0
        %v1960 = vadd.f32 %v1937, %v1959
        %1961 = vdwg.mxu0
        %vm1962 = vcmask 3072
        %1963 = vst.msk [vmem:[%s953] sm:$0xf] %vm1962, %v1960
        %p1964 = scmp.lt.s32.totalorder %s45, 1
        %s1965 = scalar_select %p1964, %s45, 1
        %s1966 = smul.addr %s1965, 4
        %s1967 = scalar_lea.vmem %s25, %s1966
        // Predicated region
        $region169: #{random_window_discriminator.1} parent=119 // pred_check
          %p1968 = pneg %p593
        $region170: #{random_window_discriminator.1} parent=119 // pred_check_branch
          %1970 = sbr.rel (%p1968) target = $region172
        $region171: #{random_window_discriminator.1} parent=119 // pred_region
          _
        $region172: #{random_window_discriminator.1} parent=119 // pred_fallthru
          _
      $region120: #{random_window_discriminator.1} parent=5 // pred_fallthru
        _
      %p1971 = scmp.le.s32.totalorder 2, %s40
      // Predicated region
      $region173: #{random_window_discriminator.1} parent=5 // pred_check
        %p1972 = pneg %p1971
      $region174: #{random_window_discriminator.1} parent=5 // pred_check_branch
        %1974 = sbr.rel (%p1972) target = $region176
      $region175: #{random_window_discriminator.1} parent=5 // pred_region
        %s1975 = ssub.s32 %s40, 2
        // Predicated region
        $region177: #{random_window_discriminator.1} parent=175 // pred_check
          %p1976 = pneg %p599
        $region178: #{random_window_discriminator.1} parent=175 // pred_check_branch
          %1978 = sbr.rel (%p1976) target = $region180
        $region179: #{random_window_discriminator.1} parent=175 // pred_region
          %p1979 = scmp.lt.s32.totalorder %s46, 1
          %s1980 = scalar_select %p1979, %s46, 1
          %s1981 = smul.addr %s1980, 4
          %s1982 = scalar_lea.vmem %s25, %s1981
        $region180: #{random_window_discriminator.1} parent=175 // pred_fallthru
          _
      $region176: #{random_window_discriminator.1} parent=5 // pred_fallthru
        _
    $region6: #{random_window_discriminator.1} parent=1 // loop_footer
      %s44 = sadd.s32 1, %s40
    $region7: #{random_window_discriminator.1} parent=1 // loop_footer_branch
      %39 = sbr.rel target = $region3
    $region8: #{random_window_discriminator.1} parent=1 // loop_exit
      _
    %1983 = vsyncpa [#allocation5], 1
    %s1984 = scalar_lea.sflag [#allocation5], 1
    %1985 = vsyncpa %s1984, 1
    %1986 = vsyncpa [#allocation7], 1
    %1987 = vsyncpa [#allocation10], 1
    %1988 = vsyncpa [#allocation13], 1
    %1989 = vsyncpa [#allocation16], 1
    %1990 = vsyncpa [#allocation19], 1
    %1991 = vsyncpa [#allocation22], 1

</llo_original>
